<compile_context>
chip_gen: v5e
topology: v5e:2x2
jax: 0.10.0
libtpu: 0.0.40
codegen_flags: <defaults>
</compile_context>

<pallas_src>
import functools

import jax
import jax.numpy as jnp
from jax import lax
from jax.experimental import pallas as pl
from jax.experimental.pallas import tpu as pltpu

LANE = 128  # TPU lane width; each gate occupies one full 128-lane block


def _lstm_fc_kernel(x_ref, wih_ref, whh_ref, b_ref,
                    w1_ref, b1_ref, w2_ref, b2_ref,
                    out_ref, xg_ref, *, T, BB, Hp):
    # ---- Preamble: input projection for ALL time steps in one MXU pass -----
    # (T*BB, Hp) bf16 @ (Hp, 4Hp) bf16 -> f32 acc; combined bias folded once.
    xg_ref[...] = (jnp.dot(x_ref[...], wih_ref[...],
                           preferred_element_type=jnp.float32)
                   + b_ref[...])

    def sig(v):  # logistic via tanh: 1 EUP push instead of exp + reciprocal
        return 0.5 * jnp.tanh(0.5 * v) + 0.5

    # ---- Serial recurrence: h/c live in vregs (loop carry), not VMEM -------
    def step(t, carry):
        h, c = carry                                         # f32 (BB, Hp)
        row = pl.multiple_of(t * BB, BB)                     # BB % 8 == 0
        gates = (xg_ref[pl.ds(row, BB), :]                   # precomputed x-part
                 + jnp.dot(h.astype(jnp.bfloat16), whh_ref[...],
                           preferred_element_type=jnp.float32))
        # lane-aligned gate views (each gate = one full 128-lane multiple)
        i_g = sig(gates[:, 0 * Hp:1 * Hp])
        f_g = sig(gates[:, 1 * Hp:2 * Hp])
        g_g = jnp.tanh(gates[:, 2 * Hp:3 * Hp])
        o_g = sig(gates[:, 3 * Hp:4 * Hp])
        c = f_g * c + i_g * g_g
        h = o_g * jnp.tanh(c)
        return h, c

    h0 = jnp.zeros((BB, Hp), jnp.float32)
    h_fin, _ = lax.fori_loop(0, T, step, (h0, h0),
                             unroll=True if T <= 32 else 8)

    # ---- FC epilogue: runs once, f32, lane-dense padded output store -------
    z1 = (jnp.dot(h_fin, w1_ref[...], preferred_element_type=jnp.float32)
          + b1_ref[...])
    z2 = (jnp.dot(z1, w2_ref[...], preferred_element_type=jnp.float32)
          + b2_ref[...])
    out_ref[...] = z2.astype(out_ref.dtype)


def pack_params(params):
    """One-time packing/padding into kernel layout (call once, cache result)."""
    emb = params["embedding"]
    V, H = emb.shape
    Hp = ((H + LANE - 1) // LANE) * LANE
    pad_h = Hp - H

    def pack_gate_weight(w):  # (4H, H) -> (Hp, 4Hp), gate-lane-aligned, bf16
        w4 = w.reshape(4, H, H)              # (gate, out, in)
        w4 = jnp.transpose(w4, (2, 0, 1))    # (in, gate, out)
        w4 = jnp.pad(w4, ((0, pad_h), (0, 0), (0, pad_h)))
        return w4.reshape(Hp, 4 * Hp).astype(jnp.bfloat16)

    b = (params["b_ih"] + params["b_hh"]).astype(jnp.float32).reshape(4, H)
    b = jnp.pad(b, ((0, 0), (0, pad_h))).reshape(1, 4 * Hp)

    F1 = params["w1"].shape[0]                               # 64
    n_out = params["w2"].shape[0]                            # 2
    return {
        # embedding pre-padded (+ bf16) so the per-call gather needs no pad
        "emb": jnp.pad(emb, ((0, 0), (0, pad_h))).astype(jnp.bfloat16),
        "wih": pack_gate_weight(params["w_ih"]),             # (Hp, 4Hp) bf16
        "whh": pack_gate_weight(params["w_hh"]),             # (Hp, 4Hp) bf16
        "b": b,                                              # (1, 4Hp) f32
        "w1": jnp.pad(params["w1"].T.astype(jnp.float32),
                      ((0, pad_h), (0, 0))),                 # (Hp, 64)
        "b1": params["b1"].astype(jnp.float32).reshape(1, F1),
        "w2": jnp.pad(params["w2"].T.astype(jnp.float32),
                      ((0, 0), (0, LANE - n_out))),          # (64, 128)
        "b2": jnp.pad(params["b2"].astype(jnp.float32).reshape(1, n_out),
                      ((0, 0), (0, LANE - n_out))),          # (1, 128)
    }


@functools.partial(jax.jit, static_argnames=("n_out",))
def rnn_forward(token_ids, packed, *, n_out=2):
    """token_ids (B, T) int32 + pre-packed params -> logits (B, n_out) f32."""
    emb = packed["emb"]
    Hp = emb.shape[1]
    F1 = packed["b1"].shape[1]
    B, T = token_ids.shape

    # Batch blocking: BB rows per grid step (multiple of 8 for sublane align).
    # "parallel" semantics lets v7x shard blocks across its two TensorCores.
    BB = min(64, ((B + 7) // 8) * 8)
    Bp = ((B + BB - 1) // BB) * BB
    nb = Bp // BB

    # Reorder token ids so a single gather lands directly in the kernel layout:
    # block b, row t*BB + j  <->  (batch b*BB + j, time t).  (tiny int32 op)
    tok = jnp.pad(token_ids.astype(jnp.int32), ((0, Bp - B), (0, 0)))
    tok = tok.reshape(nb, BB, T).transpose(0, 2, 1).reshape(nb, T * BB)
    x = jnp.take(emb, tok, axis=0)              # (nb, T*BB, Hp) bf16, padded
    # TODO(synk): fuse this gather into the kernel (scalar-prefetched token ids
    #             + manual DMA from an HBM-resident embedding) for long T.

    kernel = functools.partial(_lstm_fc_kernel, T=T, BB=BB, Hp=Hp)

    def bcast(shape):
        return pl.BlockSpec(shape, lambda b, _s=shape: (0,) * len(_s))

    out_pad = pl.pallas_call(
        kernel,
        out_shape=jax.ShapeDtypeStruct((Bp, LANE), jnp.float32),
        grid_spec=pltpu.PrefetchScalarGridSpec(
            num_scalar_prefetch=0,
            grid=(nb,),
            in_specs=[
                pl.BlockSpec((None, T * BB, Hp), lambda b: (b, 0, 0)),  # x block
                bcast((Hp, 4 * Hp)),      # W_ih^T packed (bf16)
                bcast((Hp, 4 * Hp)),      # W_hh^T packed (bf16)
                bcast((1, 4 * Hp)),       # combined bias (f32)
                bcast((Hp, F1)),          # W1^T
                bcast((1, F1)),           # b1
                bcast((F1, LANE)),        # W2^T (lane-padded)
                bcast((1, LANE)),         # b2 (lane-padded)
            ],
            out_specs=pl.BlockSpec((BB, LANE), lambda b: (b, 0)),
            scratch_shapes=[
                pltpu.VMEM((T * BB, 4 * Hp), jnp.float32),  # pre-projected gates
                # TODO(synk): chunk this over T (grid axis "arbitrary") for long
                #             sequences; v7x has only 64 MiB physical VMEM.
            ],
        ),
        compiler_params=pltpu.CompilerParams(
            dimension_semantics=("parallel",),
        ),
    )(x, packed["wih"], packed["whh"], packed["b"],
      packed["w1"], packed["b1"], packed["w2"], packed["b2"])
    return out_pad[:B, :n_out]


def reference_forward(token_ids, params, *, mxu_bf16=False):
    """Pure-JAX reference mirroring the PyTorch module semantics.

    mxu_bf16=True uses the same bf16-operand / f32-accumulate convention as the
    kernel's LSTM matmuls (fc layers are f32 in both)."""
    emb = params["embedding"]
    H = emb.shape[1]

    if mxu_bf16:
        mm = lambda a, b: jnp.dot(a.astype(jnp.bfloat16), b.astype(jnp.bfloat16),
                                  preferred_element_type=jnp.float32)
    else:
        mm = lambda a, b: jnp.dot(a, b, preferred_element_type=jnp.float32)

    x = jnp.take(emb, token_ids, axis=0)                 # (B, T, H) f32

    def step(carry, x_t):
        h, c = carry
        gates = (mm(x_t, params["w_ih"].T) + params["b_ih"]
                 + mm(h, params["w_hh"].T) + params["b_hh"])
        i = jax.nn.sigmoid(gates[:, 0 * H:1 * H])
        f = jax.nn.sigmoid(gates[:, 1 * H:2 * H])
        g = jnp.tanh(gates[:, 2 * H:3 * H])
        o = jax.nn.sigmoid(gates[:, 3 * H:4 * H])
        c = f * c + i * g
        h = o * jnp.tanh(c)
        return (h, c), None

    B = token_ids.shape[0]
    h0 = jnp.zeros((B, H), jnp.float32)
    (h, _), _ = jax.lax.scan(step, (h0, h0), jnp.transpose(x, (1, 0, 2)))
    z1 = h @ params["w1"].T + params["b1"]
    z2 = z1 @ params["w2"].T + params["b2"]
    return z2                                             # (B, 2)


def init_params(key, vocab, hidden):
    ks = jax.random.split(key, 9)
    s = 1.0 / jnp.sqrt(hidden)
    u = lambda k, shape: jax.random.uniform(k, shape, jnp.float32, -s, s)
    return {
        "embedding": jax.random.normal(ks[0], (vocab, hidden), jnp.float32),
        "w_ih": u(ks[1], (4 * hidden, hidden)),
        "w_hh": u(ks[2], (4 * hidden, hidden)),
        "b_ih": u(ks[3], (4 * hidden,)),
        "b_hh": u(ks[4], (4 * hidden,)),
        "w1": u(ks[5], (64, hidden)),
        "b1": u(ks[6], (64,)),
        "w2": u(ks[7], (2, 64)),
        "b2": u(ks[8], (2,)),
    }


if __name__ == "__main__":
    B, T, H, V = 8, 8, 32, 128   # small shapes (module defaults: H=96, V=7747)

    key = jax.random.PRNGKey(0)
    k_tok, k_par = jax.random.split(key)
    token_ids = jax.random.randint(k_tok, (B, T), 0, V, dtype=jnp.int32)
    params = init_params(k_par, V, H)

    packed = pack_params(params)                 # one-time pack (cached)
    out = rnn_forward(token_ids, packed, n_out=2)
    out = jax.block_until_ready(out)
    assert out.shape == (B, 2)

    # Exact-semantics check vs a reference using the same bf16 MXU operands.
    ref_bf16 = reference_forward(token_ids, params, mxu_bf16=True)
    assert jnp.allclose(out, ref_bf16, atol=5e-3, rtol=5e-3), \
        "mismatch vs bf16-matched reference"
    # Loose check vs the full-f32 reference (bf16 operands cost a little accuracy).
    ref_f32 = reference_forward(token_ids, params, mxu_bf16=False)
    assert jnp.allclose(out, ref_f32, atol=5e-2, rtol=5e-2), \
        "mismatch vs f32 reference"

    print("KERNEL_OK")
</pallas_src>

<mosaic_0001>
module attributes {stable_mosaic.version = 11 : i64} {
  func.func @_lstm_fc_kernel(%arg0: i32, %arg1: memref<1x64x128xbf16, #tpu.memory_space<vmem>>, %arg2: memref<128x512xbf16, #tpu.memory_space<vmem>>, %arg3: memref<128x512xbf16, #tpu.memory_space<vmem>>, %arg4: memref<1x512xf32, #tpu.memory_space<vmem>>, %arg5: memref<128x64xf32, #tpu.memory_space<vmem>>, %arg6: memref<1x64xf32, #tpu.memory_space<vmem>>, %arg7: memref<64x128xf32, #tpu.memory_space<vmem>>, %arg8: memref<1x128xf32, #tpu.memory_space<vmem>>, %arg9: memref<8x128xf32, #tpu.memory_space<vmem>>, %arg10: memref<64x512xf32, #tpu.memory_space<vmem>>) attributes {dimension_semantics = [#tpu.dimension_semantics<parallel>], iteration_bounds = array<i64: 1>, scalar_prefetch = 0 : i64, scratch_operands = 1 : i64, tpu.core_type = #tpu.core_type<tc>, window_params = [{transform_indices = @transform_0, window_bounds = array<i64: 1, 64, 128>}, {pipeline_mode = #tpu.pipeline_mode<synchronous>, transform_indices = @transform_1, window_bounds = array<i64: 128, 512>}, {pipeline_mode = #tpu.pipeline_mode<synchronous>, transform_indices = @transform_2, window_bounds = array<i64: 128, 512>}, {pipeline_mode = #tpu.pipeline_mode<synchronous>, transform_indices = @transform_3, window_bounds = array<i64: 1, 512>}, {pipeline_mode = #tpu.pipeline_mode<synchronous>, transform_indices = @transform_4, window_bounds = array<i64: 128, 64>}, {pipeline_mode = #tpu.pipeline_mode<synchronous>, transform_indices = @transform_5, window_bounds = array<i64: 1, 64>}, {pipeline_mode = #tpu.pipeline_mode<synchronous>, transform_indices = @transform_6, window_bounds = array<i64: 64, 128>}, {pipeline_mode = #tpu.pipeline_mode<synchronous>, transform_indices = @transform_7, window_bounds = array<i64: 1, 128>}, {transform_indices = @transform_8, window_bounds = array<i64: 8, 128>}]} {
    %c0 = arith.constant 0 : index
    %c0_0 = arith.constant 0 : index
    %c0_1 = arith.constant 0 : index
    %0 = vector.load %arg1[%c0, %c0_0, %c0_1] : memref<1x64x128xbf16, #tpu.memory_space<vmem>>, vector<1x64x128xbf16>
    %1 = vector.shape_cast %0 : vector<1x64x128xbf16> to vector<64x128xbf16>
    %c0_2 = arith.constant 0 : index
    %c0_3 = arith.constant 0 : index
    %2 = vector.load %arg2[%c0_2, %c0_3] : memref<128x512xbf16, #tpu.memory_space<vmem>>, vector<128x512xbf16>
    %cst = arith.constant dense<0.000000e+00> : vector<64x512xf32>
    %3 = tpu.matmul %1, %2, %cst {dimension_numbers = #tpu.dot_dimension_numbers<[1], [0], [0], [1], [0, 0, 1, 1], [], []>} : vector<64x128xbf16>, vector<128x512xbf16>, vector<64x512xf32> -> vector<64x512xf32>
    %c0_4 = arith.constant 0 : index
    %c0_5 = arith.constant 0 : index
    %4 = vector.load %arg4[%c0_4, %c0_5] : memref<1x512xf32, #tpu.memory_space<vmem>>, vector<1x512xf32>
    %5 = vector.broadcast %4 : vector<1x512xf32> to vector<64x512xf32>
    %6 = arith.addf %3, %5 : vector<64x512xf32>
    %c0_6 = arith.constant 0 : index
    %c0_7 = arith.constant 0 : index
    %7 = vector.load %arg10[%c0_6, %c0_7] : memref<64x512xf32, #tpu.memory_space<vmem>>, vector<64x512xf32>
    tpu.vector_store %arg10[%c0_6, %c0_7], %6 {strides = array<i32>} : memref<64x512xf32, #tpu.memory_space<vmem>>, vector<64x512xf32>,
    %cst_8 = arith.constant 0.000000e+00 : f32
    %8 = vector.broadcast %cst_8 : f32 to vector<8x128xf32>
    %c0_i32 = arith.constant 0 : i32
    %c8_i32 = arith.constant 8 : i32
    %9 = arith.muli %c0_i32, %c8_i32 : i32
    %10 = tpu.assume_multiple %9, 8 : i32
    %11 = arith.index_cast %10 : i32 to index
    %c0_9 = arith.constant 0 : index
    %12 = vector.load %arg10[%11, %c0_9] : memref<64x512xf32, #tpu.memory_space<vmem>>, vector<8x512xf32>
    %13 = arith.truncf %8 : vector<8x128xf32> to vector<8x128xbf16>
    %c0_10 = arith.constant 0 : index
    %c0_11 = arith.constant 0 : index
    %14 = vector.load %arg3[%c0_10, %c0_11] : memref<128x512xbf16, #tpu.memory_space<vmem>>, vector<128x512xbf16>
    %cst_12 = arith.constant dense<0.000000e+00> : vector<8x512xf32>
    %15 = tpu.matmul %13, %14, %cst_12 {dimension_numbers = #tpu.dot_dimension_numbers<[1], [0], [0], [1], [0, 0, 1, 1], [], []>} : vector<8x128xbf16>, vector<128x512xbf16>, vector<8x512xf32> -> vector<8x512xf32>
    %16 = arith.addf %12, %15 : vector<8x512xf32>
    %17 = vector.extract_strided_slice %16 {offsets = [0, 0], sizes = [8, 128], strides = [1, 1]} : vector<8x512xf32> to vector<8x128xf32>
    %cst_13 = arith.constant 5.000000e-01 : f32
    %18 = vector.broadcast %cst_13 : f32 to vector<8x128xf32>
    %19 = arith.mulf %18, %17 : vector<8x128xf32>
    %20 = math.tanh %19 : vector<8x128xf32>
    %cst_14 = arith.constant 5.000000e-01 : f32
    %21 = vector.broadcast %cst_14 : f32 to vector<8x128xf32>
    %22 = arith.mulf %21, %20 : vector<8x128xf32>
    %cst_15 = arith.constant 5.000000e-01 : f32
    %23 = vector.broadcast %cst_15 : f32 to vector<8x128xf32>
    %24 = arith.addf %22, %23 : vector<8x128xf32>
    %25 = vector.extract_strided_slice %16 {offsets = [0, 128], sizes = [8, 128], strides = [1, 1]} : vector<8x512xf32> to vector<8x128xf32>
    %cst_16 = arith.constant 5.000000e-01 : f32
    %26 = vector.broadcast %cst_16 : f32 to vector<8x128xf32>
    %27 = arith.mulf %26, %25 : vector<8x128xf32>
    %28 = math.tanh %27 : vector<8x128xf32>
    %cst_17 = arith.constant 5.000000e-01 : f32
    %29 = vector.broadcast %cst_17 : f32 to vector<8x128xf32>
    %30 = arith.mulf %29, %28 : vector<8x128xf32>
    %cst_18 = arith.constant 5.000000e-01 : f32
    %31 = vector.broadcast %cst_18 : f32 to vector<8x128xf32>
    %32 = arith.addf %30, %31 : vector<8x128xf32>
    %33 = vector.extract_strided_slice %16 {offsets = [0, 256], sizes = [8, 128], strides = [1, 1]} : vector<8x512xf32> to vector<8x128xf32>
    %34 = math.tanh %33 : vector<8x128xf32>
    %35 = vector.extract_strided_slice %16 {offsets = [0, 384], sizes = [8, 128], strides = [1, 1]} : vector<8x512xf32> to vector<8x128xf32>
    %cst_19 = arith.constant 5.000000e-01 : f32
    %36 = vector.broadcast %cst_19 : f32 to vector<8x128xf32>
    %37 = arith.mulf %36, %35 : vector<8x128xf32>
    %38 = math.tanh %37 : vector<8x128xf32>
    %cst_20 = arith.constant 5.000000e-01 : f32
    %39 = vector.broadcast %cst_20 : f32 to vector<8x128xf32>
    %40 = arith.mulf %39, %38 : vector<8x128xf32>
    %cst_21 = arith.constant 5.000000e-01 : f32
    %41 = vector.broadcast %cst_21 : f32 to vector<8x128xf32>
    %42 = arith.addf %40, %41 : vector<8x128xf32>
    %43 = arith.mulf %32, %8 : vector<8x128xf32>
    %44 = arith.mulf %24, %34 : vector<8x128xf32>
    %45 = arith.addf %43, %44 : vector<8x128xf32>
    %46 = math.tanh %45 : vector<8x128xf32>
    %47 = arith.mulf %42, %46 : vector<8x128xf32>
    %c1_i32 = arith.constant 1 : i32
    %c8_i32_22 = arith.constant 8 : i32
    %48 = arith.muli %c1_i32, %c8_i32_22 : i32
    %49 = tpu.assume_multiple %48, 8 : i32
    %50 = arith.index_cast %49 : i32 to index
    %c0_23 = arith.constant 0 : index
    %51 = vector.load %arg10[%50, %c0_23] : memref<64x512xf32, #tpu.memory_space<vmem>>, vector<8x512xf32>
    %52 = arith.truncf %47 : vector<8x128xf32> to vector<8x128xbf16>
    %c0_24 = arith.constant 0 : index
    %c0_25 = arith.constant 0 : index
    %53 = vector.load %arg3[%c0_24, %c0_25] : memref<128x512xbf16, #tpu.memory_space<vmem>>, vector<128x512xbf16>
    %cst_26 = arith.constant dense<0.000000e+00> : vector<8x512xf32>
    %54 = tpu.matmul %52, %53, %cst_26 {dimension_numbers = #tpu.dot_dimension_numbers<[1], [0], [0], [1], [0, 0, 1, 1], [], []>} : vector<8x128xbf16>, vector<128x512xbf16>, vector<8x512xf32> -> vector<8x512xf32>
    %55 = arith.addf %51, %54 : vector<8x512xf32>
    %56 = vector.extract_strided_slice %55 {offsets = [0, 0], sizes = [8, 128], strides = [1, 1]} : vector<8x512xf32> to vector<8x128xf32>
    %cst_27 = arith.constant 5.000000e-01 : f32
    %57 = vector.broadcast %cst_27 : f32 to vector<8x128xf32>
    %58 = arith.mulf %57, %56 : vector<8x128xf32>
    %59 = math.tanh %58 : vector<8x128xf32>
    %cst_28 = arith.constant 5.000000e-01 : f32
    %60 = vector.broadcast %cst_28 : f32 to vector<8x128xf32>
    %61 = arith.mulf %60, %59 : vector<8x128xf32>
    %cst_29 = arith.constant 5.000000e-01 : f32
    %62 = vector.broadcast %cst_29 : f32 to vector<8x128xf32>
    %63 = arith.addf %61, %62 : vector<8x128xf32>
    %64 = vector.extract_strided_slice %55 {offsets = [0, 128], sizes = [8, 128], strides = [1, 1]} : vector<8x512xf32> to vector<8x128xf32>
    %cst_30 = arith.constant 5.000000e-01 : f32
    %65 = vector.broadcast %cst_30 : f32 to vector<8x128xf32>
    %66 = arith.mulf %65, %64 : vector<8x128xf32>
    %67 = math.tanh %66 : vector<8x128xf32>
    %cst_31 = arith.constant 5.000000e-01 : f32
    %68 = vector.broadcast %cst_31 : f32 to vector<8x128xf32>
    %69 = arith.mulf %68, %67 : vector<8x128xf32>
    %cst_32 = arith.constant 5.000000e-01 : f32
    %70 = vector.broadcast %cst_32 : f32 to vector<8x128xf32>
    %71 = arith.addf %69, %70 : vector<8x128xf32>
    %72 = vector.extract_strided_slice %55 {offsets = [0, 256], sizes = [8, 128], strides = [1, 1]} : vector<8x512xf32> to vector<8x128xf32>
    %73 = math.tanh %72 : vector<8x128xf32>
    %74 = vector.extract_strided_slice %55 {offsets = [0, 384], sizes = [8, 128], strides = [1, 1]} : vector<8x512xf32> to vector<8x128xf32>
    %cst_33 = arith.constant 5.000000e-01 : f32
    %75 = vector.broadcast %cst_33 : f32 to vector<8x128xf32>
    %76 = arith.mulf %75, %74 : vector<8x128xf32>
    %77 = math.tanh %76 : vector<8x128xf32>
    %cst_34 = arith.constant 5.000000e-01 : f32
    %78 = vector.broadcast %cst_34 : f32 to vector<8x128xf32>
    %79 = arith.mulf %78, %77 : vector<8x128xf32>
    %cst_35 = arith.constant 5.000000e-01 : f32
    %80 = vector.broadcast %cst_35 : f32 to vector<8x128xf32>
    %81 = arith.addf %79, %80 : vector<8x128xf32>
    %82 = arith.mulf %71, %45 : vector<8x128xf32>
    %83 = arith.mulf %63, %73 : vector<8x128xf32>
    %84 = arith.addf %82, %83 : vector<8x128xf32>
    %85 = math.tanh %84 : vector<8x128xf32>
    %86 = arith.mulf %81, %85 : vector<8x128xf32>
    %c2_i32 = arith.constant 2 : i32
    %c8_i32_36 = arith.constant 8 : i32
    %87 = arith.muli %c2_i32, %c8_i32_36 : i32
    %88 = tpu.assume_multiple %87, 8 : i32
    %89 = arith.index_cast %88 : i32 to index
    %c0_37 = arith.constant 0 : index
    %90 = vector.load %arg10[%89, %c0_37] : memref<64x512xf32, #tpu.memory_space<vmem>>, vector<8x512xf32>
    %91 = arith.truncf %86 : vector<8x128xf32> to vector<8x128xbf16>
    %c0_38 = arith.constant 0 : index
    %c0_39 = arith.constant 0 : index
    %92 = vector.load %arg3[%c0_38, %c0_39] : memref<128x512xbf16, #tpu.memory_space<vmem>>, vector<128x512xbf16>
    %cst_40 = arith.constant dense<0.000000e+00> : vector<8x512xf32>
    %93 = tpu.matmul %91, %92, %cst_40 {dimension_numbers = #tpu.dot_dimension_numbers<[1], [0], [0], [1], [0, 0, 1, 1], [], []>} : vector<8x128xbf16>, vector<128x512xbf16>, vector<8x512xf32> -> vector<8x512xf32>
    %94 = arith.addf %90, %93 : vector<8x512xf32>
    %95 = vector.extract_strided_slice %94 {offsets = [0, 0], sizes = [8, 128], strides = [1, 1]} : vector<8x512xf32> to vector<8x128xf32>
    %cst_41 = arith.constant 5.000000e-01 : f32
    %96 = vector.broadcast %cst_41 : f32 to vector<8x128xf32>
    %97 = arith.mulf %96, %95 : vector<8x128xf32>
    %98 = math.tanh %97 : vector<8x128xf32>
    %cst_42 = arith.constant 5.000000e-01 : f32
    %99 = vector.broadcast %cst_42 : f32 to vector<8x128xf32>
    %100 = arith.mulf %99, %98 : vector<8x128xf32>
    %cst_43 = arith.constant 5.000000e-01 : f32
    %101 = vector.broadcast %cst_43 : f32 to vector<8x128xf32>
    %102 = arith.addf %100, %101 : vector<8x128xf32>
    %103 = vector.extract_strided_slice %94 {offsets = [0, 128], sizes = [8, 128], strides = [1, 1]} : vector<8x512xf32> to vector<8x128xf32>
    %cst_44 = arith.constant 5.000000e-01 : f32
    %104 = vector.broadcast %cst_44 : f32 to vector<8x128xf32>
    %105 = arith.mulf %104, %103 : vector<8x128xf32>
    %106 = math.tanh %105 : vector<8x128xf32>
    %cst_45 = arith.constant 5.000000e-01 : f32
    %107 = vector.broadcast %cst_45 : f32 to vector<8x128xf32>
    %108 = arith.mulf %107, %106 : vector<8x128xf32>
    %cst_46 = arith.constant 5.000000e-01 : f32
    %109 = vector.broadcast %cst_46 : f32 to vector<8x128xf32>
    %110 = arith.addf %108, %109 : vector<8x128xf32>
    %111 = vector.extract_strided_slice %94 {offsets = [0, 256], sizes = [8, 128], strides = [1, 1]} : vector<8x512xf32> to vector<8x128xf32>
    %112 = math.tanh %111 : vector<8x128xf32>
    %113 = vector.extract_strided_slice %94 {offsets = [0, 384], sizes = [8, 128], strides = [1, 1]} : vector<8x512xf32> to vector<8x128xf32>
    %cst_47 = arith.constant 5.000000e-01 : f32
    %114 = vector.broadcast %cst_47 : f32 to vector<8x128xf32>
    %115 = arith.mulf %114, %113 : vector<8x128xf32>
    %116 = math.tanh %115 : vector<8x128xf32>
    %cst_48 = arith.constant 5.000000e-01 : f32
    %117 = vector.broadcast %cst_48 : f32 to vector<8x128xf32>
    %118 = arith.mulf %117, %116 : vector<8x128xf32>
    %cst_49 = arith.constant 5.000000e-01 : f32
    %119 = vector.broadcast %cst_49 : f32 to vector<8x128xf32>
    %120 = arith.addf %118, %119 : vector<8x128xf32>
    %121 = arith.mulf %110, %84 : vector<8x128xf32>
    %122 = arith.mulf %102, %112 : vector<8x128xf32>
    %123 = arith.addf %121, %122 : vector<8x128xf32>
    %124 = math.tanh %123 : vector<8x128xf32>
    %125 = arith.mulf %120, %124 : vector<8x128xf32>
    %c3_i32 = arith.constant 3 : i32
    %c8_i32_50 = arith.constant 8 : i32
    %126 = arith.muli %c3_i32, %c8_i32_50 : i32
    %127 = tpu.assume_multiple %126, 8 : i32
    %128 = arith.index_cast %127 : i32 to index
    %c0_51 = arith.constant 0 : index
    %129 = vector.load %arg10[%128, %c0_51] : memref<64x512xf32, #tpu.memory_space<vmem>>, vector<8x512xf32>
    %130 = arith.truncf %125 : vector<8x128xf32> to vector<8x128xbf16>
    %c0_52 = arith.constant 0 : index
    %c0_53 = arith.constant 0 : index
    %131 = vector.load %arg3[%c0_52, %c0_53] : memref<128x512xbf16, #tpu.memory_space<vmem>>, vector<128x512xbf16>
    %cst_54 = arith.constant dense<0.000000e+00> : vector<8x512xf32>
    %132 = tpu.matmul %130, %131, %cst_54 {dimension_numbers = #tpu.dot_dimension_numbers<[1], [0], [0], [1], [0, 0, 1, 1], [], []>} : vector<8x128xbf16>, vector<128x512xbf16>, vector<8x512xf32> -> vector<8x512xf32>
    %133 = arith.addf %129, %132 : vector<8x512xf32>
    %134 = vector.extract_strided_slice %133 {offsets = [0, 0], sizes = [8, 128], strides = [1, 1]} : vector<8x512xf32> to vector<8x128xf32>
    %cst_55 = arith.constant 5.000000e-01 : f32
    %135 = vector.broadcast %cst_55 : f32 to vector<8x128xf32>
    %136 = arith.mulf %135, %134 : vector<8x128xf32>
    %137 = math.tanh %136 : vector<8x128xf32>
    %cst_56 = arith.constant 5.000000e-01 : f32
    %138 = vector.broadcast %cst_56 : f32 to vector<8x128xf32>
    %139 = arith.mulf %138, %137 : vector<8x128xf32>
    %cst_57 = arith.constant 5.000000e-01 : f32
    %140 = vector.broadcast %cst_57 : f32 to vector<8x128xf32>
    %141 = arith.addf %139, %140 : vector<8x128xf32>
    %142 = vector.extract_strided_slice %133 {offsets = [0, 128], sizes = [8, 128], strides = [1, 1]} : vector<8x512xf32> to vector<8x128xf32>
    %cst_58 = arith.constant 5.000000e-01 : f32
    %143 = vector.broadcast %cst_58 : f32 to vector<8x128xf32>
    %144 = arith.mulf %143, %142 : vector<8x128xf32>
    %145 = math.tanh %144 : vector<8x128xf32>
    %cst_59 = arith.constant 5.000000e-01 : f32
    %146 = vector.broadcast %cst_59 : f32 to vector<8x128xf32>
    %147 = arith.mulf %146, %145 : vector<8x128xf32>
    %cst_60 = arith.constant 5.000000e-01 : f32
    %148 = vector.broadcast %cst_60 : f32 to vector<8x128xf32>
    %149 = arith.addf %147, %148 : vector<8x128xf32>
    %150 = vector.extract_strided_slice %133 {offsets = [0, 256], sizes = [8, 128], strides = [1, 1]} : vector<8x512xf32> to vector<8x128xf32>
    %151 = math.tanh %150 : vector<8x128xf32>
    %152 = vector.extract_strided_slice %133 {offsets = [0, 384], sizes = [8, 128], strides = [1, 1]} : vector<8x512xf32> to vector<8x128xf32>
    %cst_61 = arith.constant 5.000000e-01 : f32
    %153 = vector.broadcast %cst_61 : f32 to vector<8x128xf32>
    %154 = arith.mulf %153, %152 : vector<8x128xf32>
    %155 = math.tanh %154 : vector<8x128xf32>
    %cst_62 = arith.constant 5.000000e-01 : f32
    %156 = vector.broadcast %cst_62 : f32 to vector<8x128xf32>
    %157 = arith.mulf %156, %155 : vector<8x128xf32>
    %cst_63 = arith.constant 5.000000e-01 : f32
    %158 = vector.broadcast %cst_63 : f32 to vector<8x128xf32>
    %159 = arith.addf %157, %158 : vector<8x128xf32>
    %160 = arith.mulf %149, %123 : vector<8x128xf32>
    %161 = arith.mulf %141, %151 : vector<8x128xf32>
    %162 = arith.addf %160, %161 : vector<8x128xf32>
    %163 = math.tanh %162 : vector<8x128xf32>
    %164 = arith.mulf %159, %163 : vector<8x128xf32>
    %c4_i32 = arith.constant 4 : i32
    %c8_i32_64 = arith.constant 8 : i32
    %165 = arith.muli %c4_i32, %c8_i32_64 : i32
    %166 = tpu.assume_multiple %165, 8 : i32
    %167 = arith.index_cast %166 : i32 to index
    %c0_65 = arith.constant 0 : index
    %168 = vector.load %arg10[%167, %c0_65] : memref<64x512xf32, #tpu.memory_space<vmem>>, vector<8x512xf32>
    %169 = arith.truncf %164 : vector<8x128xf32> to vector<8x128xbf16>
    %c0_66 = arith.constant 0 : index
    %c0_67 = arith.constant 0 : index
    %170 = vector.load %arg3[%c0_66, %c0_67] : memref<128x512xbf16, #tpu.memory_space<vmem>>, vector<128x512xbf16>
    %cst_68 = arith.constant dense<0.000000e+00> : vector<8x512xf32>
    %171 = tpu.matmul %169, %170, %cst_68 {dimension_numbers = #tpu.dot_dimension_numbers<[1], [0], [0], [1], [0, 0, 1, 1], [], []>} : vector<8x128xbf16>, vector<128x512xbf16>, vector<8x512xf32> -> vector<8x512xf32>
    %172 = arith.addf %168, %171 : vector<8x512xf32>
    %173 = vector.extract_strided_slice %172 {offsets = [0, 0], sizes = [8, 128], strides = [1, 1]} : vector<8x512xf32> to vector<8x128xf32>
    %cst_69 = arith.constant 5.000000e-01 : f32
    %174 = vector.broadcast %cst_69 : f32 to vector<8x128xf32>
    %175 = arith.mulf %174, %173 : vector<8x128xf32>
    %176 = math.tanh %175 : vector<8x128xf32>
    %cst_70 = arith.constant 5.000000e-01 : f32
    %177 = vector.broadcast %cst_70 : f32 to vector<8x128xf32>
    %178 = arith.mulf %177, %176 : vector<8x128xf32>
    %cst_71 = arith.constant 5.000000e-01 : f32
    %179 = vector.broadcast %cst_71 : f32 to vector<8x128xf32>
    %180 = arith.addf %178, %179 : vector<8x128xf32>
    %181 = vector.extract_strided_slice %172 {offsets = [0, 128], sizes = [8, 128], strides = [1, 1]} : vector<8x512xf32> to vector<8x128xf32>
    %cst_72 = arith.constant 5.000000e-01 : f32
    %182 = vector.broadcast %cst_72 : f32 to vector<8x128xf32>
    %183 = arith.mulf %182, %181 : vector<8x128xf32>
    %184 = math.tanh %183 : vector<8x128xf32>
    %cst_73 = arith.constant 5.000000e-01 : f32
    %185 = vector.broadcast %cst_73 : f32 to vector<8x128xf32>
    %186 = arith.mulf %185, %184 : vector<8x128xf32>
    %cst_74 = arith.constant 5.000000e-01 : f32
    %187 = vector.broadcast %cst_74 : f32 to vector<8x128xf32>
    %188 = arith.addf %186, %187 : vector<8x128xf32>
    %189 = vector.extract_strided_slice %172 {offsets = [0, 256], sizes = [8, 128], strides = [1, 1]} : vector<8x512xf32> to vector<8x128xf32>
    %190 = math.tanh %189 : vector<8x128xf32>
    %191 = vector.extract_strided_slice %172 {offsets = [0, 384], sizes = [8, 128], strides = [1, 1]} : vector<8x512xf32> to vector<8x128xf32>
    %cst_75 = arith.constant 5.000000e-01 : f32
    %192 = vector.broadcast %cst_75 : f32 to vector<8x128xf32>
    %193 = arith.mulf %192, %191 : vector<8x128xf32>
    %194 = math.tanh %193 : vector<8x128xf32>
    %cst_76 = arith.constant 5.000000e-01 : f32
    %195 = vector.broadcast %cst_76 : f32 to vector<8x128xf32>
    %196 = arith.mulf %195, %194 : vector<8x128xf32>
    %cst_77 = arith.constant 5.000000e-01 : f32
    %197 = vector.broadcast %cst_77 : f32 to vector<8x128xf32>
    %198 = arith.addf %196, %197 : vector<8x128xf32>
    %199 = arith.mulf %188, %162 : vector<8x128xf32>
    %200 = arith.mulf %180, %190 : vector<8x128xf32>
    %201 = arith.addf %199, %200 : vector<8x128xf32>
    %202 = math.tanh %201 : vector<8x128xf32>
    %203 = arith.mulf %198, %202 : vector<8x128xf32>
    %c5_i32 = arith.constant 5 : i32
    %c8_i32_78 = arith.constant 8 : i32
    %204 = arith.muli %c5_i32, %c8_i32_78 : i32
    %205 = tpu.assume_multiple %204, 8 : i32
    %206 = arith.index_cast %205 : i32 to index
    %c0_79 = arith.constant 0 : index
    %207 = vector.load %arg10[%206, %c0_79] : memref<64x512xf32, #tpu.memory_space<vmem>>, vector<8x512xf32>
    %208 = arith.truncf %203 : vector<8x128xf32> to vector<8x128xbf16>
    %c0_80 = arith.constant 0 : index
    %c0_81 = arith.constant 0 : index
    %209 = vector.load %arg3[%c0_80, %c0_81] : memref<128x512xbf16, #tpu.memory_space<vmem>>, vector<128x512xbf16>
    %cst_82 = arith.constant dense<0.000000e+00> : vector<8x512xf32>
    %210 = tpu.matmul %208, %209, %cst_82 {dimension_numbers = #tpu.dot_dimension_numbers<[1], [0], [0], [1], [0, 0, 1, 1], [], []>} : vector<8x128xbf16>, vector<128x512xbf16>, vector<8x512xf32> -> vector<8x512xf32>
    %211 = arith.addf %207, %210 : vector<8x512xf32>
    %212 = vector.extract_strided_slice %211 {offsets = [0, 0], sizes = [8, 128], strides = [1, 1]} : vector<8x512xf32> to vector<8x128xf32>
    %cst_83 = arith.constant 5.000000e-01 : f32
    %213 = vector.broadcast %cst_83 : f32 to vector<8x128xf32>
    %214 = arith.mulf %213, %212 : vector<8x128xf32>
    %215 = math.tanh %214 : vector<8x128xf32>
    %cst_84 = arith.constant 5.000000e-01 : f32
    %216 = vector.broadcast %cst_84 : f32 to vector<8x128xf32>
    %217 = arith.mulf %216, %215 : vector<8x128xf32>
    %cst_85 = arith.constant 5.000000e-01 : f32
    %218 = vector.broadcast %cst_85 : f32 to vector<8x128xf32>
    %219 = arith.addf %217, %218 : vector<8x128xf32>
    %220 = vector.extract_strided_slice %211 {offsets = [0, 128], sizes = [8, 128], strides = [1, 1]} : vector<8x512xf32> to vector<8x128xf32>
    %cst_86 = arith.constant 5.000000e-01 : f32
    %221 = vector.broadcast %cst_86 : f32 to vector<8x128xf32>
    %222 = arith.mulf %221, %220 : vector<8x128xf32>
    %223 = math.tanh %222 : vector<8x128xf32>
    %cst_87 = arith.constant 5.000000e-01 : f32
    %224 = vector.broadcast %cst_87 : f32 to vector<8x128xf32>
    %225 = arith.mulf %224, %223 : vector<8x128xf32>
    %cst_88 = arith.constant 5.000000e-01 : f32
    %226 = vector.broadcast %cst_88 : f32 to vector<8x128xf32>
    %227 = arith.addf %225, %226 : vector<8x128xf32>
    %228 = vector.extract_strided_slice %211 {offsets = [0, 256], sizes = [8, 128], strides = [1, 1]} : vector<8x512xf32> to vector<8x128xf32>
    %229 = math.tanh %228 : vector<8x128xf32>
    %230 = vector.extract_strided_slice %211 {offsets = [0, 384], sizes = [8, 128], strides = [1, 1]} : vector<8x512xf32> to vector<8x128xf32>
    %cst_89 = arith.constant 5.000000e-01 : f32
    %231 = vector.broadcast %cst_89 : f32 to vector<8x128xf32>
    %232 = arith.mulf %231, %230 : vector<8x128xf32>
    %233 = math.tanh %232 : vector<8x128xf32>
    %cst_90 = arith.constant 5.000000e-01 : f32
    %234 = vector.broadcast %cst_90 : f32 to vector<8x128xf32>
    %235 = arith.mulf %234, %233 : vector<8x128xf32>
    %cst_91 = arith.constant 5.000000e-01 : f32
    %236 = vector.broadcast %cst_91 : f32 to vector<8x128xf32>
    %237 = arith.addf %235, %236 : vector<8x128xf32>
    %238 = arith.mulf %227, %201 : vector<8x128xf32>
    %239 = arith.mulf %219, %229 : vector<8x128xf32>
    %240 = arith.addf %238, %239 : vector<8x128xf32>
    %241 = math.tanh %240 : vector<8x128xf32>
    %242 = arith.mulf %237, %241 : vector<8x128xf32>
    %c6_i32 = arith.constant 6 : i32
    %c8_i32_92 = arith.constant 8 : i32
    %243 = arith.muli %c6_i32, %c8_i32_92 : i32
    %244 = tpu.assume_multiple %243, 8 : i32
    %245 = arith.index_cast %244 : i32 to index
    %c0_93 = arith.constant 0 : index
    %246 = vector.load %arg10[%245, %c0_93] : memref<64x512xf32, #tpu.memory_space<vmem>>, vector<8x512xf32>
    %247 = arith.truncf %242 : vector<8x128xf32> to vector<8x128xbf16>
    %c0_94 = arith.constant 0 : index
    %c0_95 = arith.constant 0 : index
    %248 = vector.load %arg3[%c0_94, %c0_95] : memref<128x512xbf16, #tpu.memory_space<vmem>>, vector<128x512xbf16>
    %cst_96 = arith.constant dense<0.000000e+00> : vector<8x512xf32>
    %249 = tpu.matmul %247, %248, %cst_96 {dimension_numbers = #tpu.dot_dimension_numbers<[1], [0], [0], [1], [0, 0, 1, 1], [], []>} : vector<8x128xbf16>, vector<128x512xbf16>, vector<8x512xf32> -> vector<8x512xf32>
    %250 = arith.addf %246, %249 : vector<8x512xf32>
    %251 = vector.extract_strided_slice %250 {offsets = [0, 0], sizes = [8, 128], strides = [1, 1]} : vector<8x512xf32> to vector<8x128xf32>
    %cst_97 = arith.constant 5.000000e-01 : f32
    %252 = vector.broadcast %cst_97 : f32 to vector<8x128xf32>
    %253 = arith.mulf %252, %251 : vector<8x128xf32>
    %254 = math.tanh %253 : vector<8x128xf32>
    %cst_98 = arith.constant 5.000000e-01 : f32
    %255 = vector.broadcast %cst_98 : f32 to vector<8x128xf32>
    %256 = arith.mulf %255, %254 : vector<8x128xf32>
    %cst_99 = arith.constant 5.000000e-01 : f32
    %257 = vector.broadcast %cst_99 : f32 to vector<8x128xf32>
    %258 = arith.addf %256, %257 : vector<8x128xf32>
    %259 = vector.extract_strided_slice %250 {offsets = [0, 128], sizes = [8, 128], strides = [1, 1]} : vector<8x512xf32> to vector<8x128xf32>
    %cst_100 = arith.constant 5.000000e-01 : f32
    %260 = vector.broadcast %cst_100 : f32 to vector<8x128xf32>
    %261 = arith.mulf %260, %259 : vector<8x128xf32>
    %262 = math.tanh %261 : vector<8x128xf32>
    %cst_101 = arith.constant 5.000000e-01 : f32
    %263 = vector.broadcast %cst_101 : f32 to vector<8x128xf32>
    %264 = arith.mulf %263, %262 : vector<8x128xf32>
    %cst_102 = arith.constant 5.000000e-01 : f32
    %265 = vector.broadcast %cst_102 : f32 to vector<8x128xf32>
    %266 = arith.addf %264, %265 : vector<8x128xf32>
    %267 = vector.extract_strided_slice %250 {offsets = [0, 256], sizes = [8, 128], strides = [1, 1]} : vector<8x512xf32> to vector<8x128xf32>
    %268 = math.tanh %267 : vector<8x128xf32>
    %269 = vector.extract_strided_slice %250 {offsets = [0, 384], sizes = [8, 128], strides = [1, 1]} : vector<8x512xf32> to vector<8x128xf32>
    %cst_103 = arith.constant 5.000000e-01 : f32
    %270 = vector.broadcast %cst_103 : f32 to vector<8x128xf32>
    %271 = arith.mulf %270, %269 : vector<8x128xf32>
    %272 = math.tanh %271 : vector<8x128xf32>
    %cst_104 = arith.constant 5.000000e-01 : f32
    %273 = vector.broadcast %cst_104 : f32 to vector<8x128xf32>
    %274 = arith.mulf %273, %272 : vector<8x128xf32>
    %cst_105 = arith.constant 5.000000e-01 : f32
    %275 = vector.broadcast %cst_105 : f32 to vector<8x128xf32>
    %276 = arith.addf %274, %275 : vector<8x128xf32>
    %277 = arith.mulf %266, %240 : vector<8x128xf32>
    %278 = arith.mulf %258, %268 : vector<8x128xf32>
    %279 = arith.addf %277, %278 : vector<8x128xf32>
    %280 = math.tanh %279 : vector<8x128xf32>
    %281 = arith.mulf %276, %280 : vector<8x128xf32>
    %c7_i32 = arith.constant 7 : i32
    %c8_i32_106 = arith.constant 8 : i32
    %282 = arith.muli %c7_i32, %c8_i32_106 : i32
    %283 = tpu.assume_multiple %282, 8 : i32
    %284 = arith.index_cast %283 : i32 to index
    %c0_107 = arith.constant 0 : index
    %285 = vector.load %arg10[%284, %c0_107] : memref<64x512xf32, #tpu.memory_space<vmem>>, vector<8x512xf32>
    %286 = arith.truncf %281 : vector<8x128xf32> to vector<8x128xbf16>
    %c0_108 = arith.constant 0 : index
    %c0_109 = arith.constant 0 : index
    %287 = vector.load %arg3[%c0_108, %c0_109] : memref<128x512xbf16, #tpu.memory_space<vmem>>, vector<128x512xbf16>
    %cst_110 = arith.constant dense<0.000000e+00> : vector<8x512xf32>
    %288 = tpu.matmul %286, %287, %cst_110 {dimension_numbers = #tpu.dot_dimension_numbers<[1], [0], [0], [1], [0, 0, 1, 1], [], []>} : vector<8x128xbf16>, vector<128x512xbf16>, vector<8x512xf32> -> vector<8x512xf32>
    %289 = arith.addf %285, %288 : vector<8x512xf32>
    %290 = vector.extract_strided_slice %289 {offsets = [0, 0], sizes = [8, 128], strides = [1, 1]} : vector<8x512xf32> to vector<8x128xf32>
    %cst_111 = arith.constant 5.000000e-01 : f32
    %291 = vector.broadcast %cst_111 : f32 to vector<8x128xf32>
    %292 = arith.mulf %291, %290 : vector<8x128xf32>
    %293 = math.tanh %292 : vector<8x128xf32>
    %cst_112 = arith.constant 5.000000e-01 : f32
    %294 = vector.broadcast %cst_112 : f32 to vector<8x128xf32>
    %295 = arith.mulf %294, %293 : vector<8x128xf32>
    %cst_113 = arith.constant 5.000000e-01 : f32
    %296 = vector.broadcast %cst_113 : f32 to vector<8x128xf32>
    %297 = arith.addf %295, %296 : vector<8x128xf32>
    %298 = vector.extract_strided_slice %289 {offsets = [0, 128], sizes = [8, 128], strides = [1, 1]} : vector<8x512xf32> to vector<8x128xf32>
    %cst_114 = arith.constant 5.000000e-01 : f32
    %299 = vector.broadcast %cst_114 : f32 to vector<8x128xf32>
    %300 = arith.mulf %299, %298 : vector<8x128xf32>
    %301 = math.tanh %300 : vector<8x128xf32>
    %cst_115 = arith.constant 5.000000e-01 : f32
    %302 = vector.broadcast %cst_115 : f32 to vector<8x128xf32>
    %303 = arith.mulf %302, %301 : vector<8x128xf32>
    %cst_116 = arith.constant 5.000000e-01 : f32
    %304 = vector.broadcast %cst_116 : f32 to vector<8x128xf32>
    %305 = arith.addf %303, %304 : vector<8x128xf32>
    %306 = vector.extract_strided_slice %289 {offsets = [0, 256], sizes = [8, 128], strides = [1, 1]} : vector<8x512xf32> to vector<8x128xf32>
    %307 = math.tanh %306 : vector<8x128xf32>
    %308 = vector.extract_strided_slice %289 {offsets = [0, 384], sizes = [8, 128], strides = [1, 1]} : vector<8x512xf32> to vector<8x128xf32>
    %cst_117 = arith.constant 5.000000e-01 : f32
    %309 = vector.broadcast %cst_117 : f32 to vector<8x128xf32>
    %310 = arith.mulf %309, %308 : vector<8x128xf32>
    %311 = math.tanh %310 : vector<8x128xf32>
    %cst_118 = arith.constant 5.000000e-01 : f32
    %312 = vector.broadcast %cst_118 : f32 to vector<8x128xf32>
    %313 = arith.mulf %312, %311 : vector<8x128xf32>
    %cst_119 = arith.constant 5.000000e-01 : f32
    %314 = vector.broadcast %cst_119 : f32 to vector<8x128xf32>
    %315 = arith.addf %313, %314 : vector<8x128xf32>
    %316 = arith.mulf %305, %279 : vector<8x128xf32>
    %317 = arith.mulf %297, %307 : vector<8x128xf32>
    %318 = arith.addf %316, %317 : vector<8x128xf32>
    %319 = math.tanh %318 : vector<8x128xf32>
    %320 = arith.mulf %315, %319 : vector<8x128xf32>
    %c8_i32_120 = arith.constant 8 : i32
    %c0_121 = arith.constant 0 : index
    %c0_122 = arith.constant 0 : index
    %321 = vector.load %arg5[%c0_121, %c0_122] : memref<128x64xf32, #tpu.memory_space<vmem>>, vector<128x64xf32>
    %cst_123 = arith.constant dense<0.000000e+00> : vector<8x64xf32>
    %322 = tpu.matmul %320, %321, %cst_123 {dimension_numbers = #tpu.dot_dimension_numbers<[1], [0], [0], [1], [0, 0, 1, 1], [], []>} : vector<8x128xf32>, vector<128x64xf32>, vector<8x64xf32> -> vector<8x64xf32>
    %c0_124 = arith.constant 0 : index
    %c0_125 = arith.constant 0 : index
    %323 = vector.load %arg6[%c0_124, %c0_125] : memref<1x64xf32, #tpu.memory_space<vmem>>, vector<1x64xf32>
    %324 = vector.broadcast %323 : vector<1x64xf32> to vector<8x64xf32>
    %325 = arith.addf %322, %324 : vector<8x64xf32>
    %c0_126 = arith.constant 0 : index
    %c0_127 = arith.constant 0 : index
    %326 = vector.load %arg7[%c0_126, %c0_127] : memref<64x128xf32, #tpu.memory_space<vmem>>, vector<64x128xf32>
    %cst_128 = arith.constant dense<0.000000e+00> : vector<8x128xf32>
    %327 = tpu.matmul %325, %326, %cst_128 {dimension_numbers = #tpu.dot_dimension_numbers<[1], [0], [0], [1], [0, 0, 1, 1], [], []>} : vector<8x64xf32>, vector<64x128xf32>, vector<8x128xf32> -> vector<8x128xf32>
    %c0_129 = arith.constant 0 : index
    %c0_130 = arith.constant 0 : index
    %328 = vector.load %arg8[%c0_129, %c0_130] : memref<1x128xf32, #tpu.memory_space<vmem>>, vector<1x128xf32>
    %329 = vector.broadcast %328 : vector<1x128xf32> to vector<8x128xf32>
    %330 = arith.addf %327, %329 : vector<8x128xf32>
    %c0_131 = arith.constant 0 : index
    %c0_132 = arith.constant 0 : index
    %331 = vector.load %arg9[%c0_131, %c0_132] : memref<8x128xf32, #tpu.memory_space<vmem>>, vector<8x128xf32>
    tpu.vector_store %arg9[%c0_131, %c0_132], %330 {strides = array<i32>} : memref<8x128xf32, #tpu.memory_space<vmem>>, vector<8x128xf32>,
    return
  }
  func.func @transform_0(%arg0: i32) -> (i32, i32, i32) {
    %c0_i32 = arith.constant 0 : i32
    %c0_i32_0 = arith.constant 0 : i32
    %c0_i32_1 = arith.constant 0 : i32
    return %arg0, %c0_i32, %c0_i32_0 : i32, i32, i32
  }
  func.func @transform_1(%arg0: i32) -> (i32, i32) {
    %c0_i32 = arith.constant 0 : i32
    %c0_i32_0 = arith.constant 0 : i32
    %c0_i32_1 = arith.constant 0 : i32
    return %c0_i32, %c0_i32_0 : i32, i32
  }
  func.func @transform_2(%arg0: i32) -> (i32, i32) {
    %c0_i32 = arith.constant 0 : i32
    %c0_i32_0 = arith.constant 0 : i32
    %c0_i32_1 = arith.constant 0 : i32
    return %c0_i32, %c0_i32_0 : i32, i32
  }
  func.func @transform_3(%arg0: i32) -> (i32, i32) {
    %c0_i32 = arith.constant 0 : i32
    %c0_i32_0 = arith.constant 0 : i32
    %c0_i32_1 = arith.constant 0 : i32
    return %c0_i32, %c0_i32_0 : i32, i32
  }
  func.func @transform_4(%arg0: i32) -> (i32, i32) {
    %c0_i32 = arith.constant 0 : i32
    %c0_i32_0 = arith.constant 0 : i32
    %c0_i32_1 = arith.constant 0 : i32
    return %c0_i32, %c0_i32_0 : i32, i32
  }
  func.func @transform_5(%arg0: i32) -> (i32, i32) {
    %c0_i32 = arith.constant 0 : i32
    %c0_i32_0 = arith.constant 0 : i32
    %c0_i32_1 = arith.constant 0 : i32
    return %c0_i32, %c0_i32_0 : i32, i32
  }
  func.func @transform_6(%arg0: i32) -> (i32, i32) {
    %c0_i32 = arith.constant 0 : i32
    %c0_i32_0 = arith.constant 0 : i32
    %c0_i32_1 = arith.constant 0 : i32
    return %c0_i32, %c0_i32_0 : i32, i32
  }
  func.func @transform_7(%arg0: i32) -> (i32, i32) {
    %c0_i32 = arith.constant 0 : i32
    %c0_i32_0 = arith.constant 0 : i32
    %c0_i32_1 = arith.constant 0 : i32
    return %c0_i32, %c0_i32_0 : i32, i32
  }
  func.func @transform_8(%arg0: i32) -> (i32, i32) {
    %c0_i32 = arith.constant 0 : i32
    %c0_i32_0 = arith.constant 0 : i32
    return %arg0, %c0_i32 : i32, i32
  }
}

</mosaic_0001>

<llo_original>
// kernel: rnn_forward.1
$region0: #{rnn_forward.1}
  #allocation0 [shape = 'u32[]', space=smem, size = 0x4, offset = 0x4, fixed_abs, tag = 'smem constant byte address 0x4 - core index']
  #allocation1 [shape = 'u32[72,128]{1,0:T(1,128)}', space=vmem, size = 0x9000, scoped, tag = 'internal scratch']
  #allocation2 [shape = 'f32[64,512]{1,0:T(8,128)}', space=vmem, size = 0x20000, scoped, tag = 'scratch operand']
  %s0 = inlined_call_operand.vmem [shape: bf16[1,64,128], index: 0, kind: input, shape index: {}]
  %s1 = inlined_call_operand.vmem [shape: bf16[128,512], index: 1, kind: input, shape index: {}]
  %s2 = inlined_call_operand.hbm [shape: bf16[128,512], index: 2, kind: input, shape index: {}]
  %s3 = inlined_call_operand.vmem [shape: f32[1,512], index: 3, kind: input, shape index: {}]
  %s4 = inlined_call_operand.vmem [shape: f32[128,64], index: 4, kind: input, shape index: {}]
  %s5 = inlined_call_operand.vmem [shape: f32[1,64], index: 5, kind: input, shape index: {}]
  %s6 = inlined_call_operand.vmem [shape: f32[64,128], index: 6, kind: input, shape index: {}]
  %s7 = inlined_call_operand.vmem [shape: f32[1,128], index: 7, kind: input, shape index: {}]
  %s8 = inlined_call_operand.vmem [shape: f32[8,128], index: 8, kind: output, shape index: {}]
  %s9 = sld [smem:[#allocation0]]
  $region46: #{rnn_forward.1} parent=0
    _
  %s11 = ssub.s32 1, %s9
  %s12 = scalar_select 0, %s11, %s9
  $region1: #{rnn_forward.1} parent=0
    #allocation3 [shape = 'u8[131072]{0}', space=vmem, size = 0x20000, scoped, tag = 'input window, operand 2, single buffered']
    #allocation4 [shape = 's32[1]{0}', space=sflag, size = 0x4, scoped, tag = 'scoped memory for rnn_forward.1']
    %13 = vsyncpa [#allocation4], 0
    // Predicated region
    $region2: #{rnn_forward.1} parent=1 // pred_check
      _
    $region3: #{rnn_forward.1} parent=1 // pred_check_branch
      %15 = sbr.rel (0) target = $region5
    $region4: #{rnn_forward.1} parent=1 // pred_region
      _
    $region5: #{rnn_forward.1} parent=1 // pred_fallthru
      _
    // Predicated region
    $region6: #{rnn_forward.1} parent=1 // pred_check
      _
    $region7: #{rnn_forward.1} parent=1 // pred_check_branch
      %17 = sbr.rel (0) target = $region9
    $region8: #{rnn_forward.1} parent=1 // pred_region
      _
    $region9: #{rnn_forward.1} parent=1 // pred_fallthru
      _
    // Predicated region
    $region10: #{rnn_forward.1} parent=1 // pred_check
      _
    $region11: #{rnn_forward.1} parent=1 // pred_check_branch
      %19 = sbr.rel (0) target = $region13
    $region12: #{rnn_forward.1} parent=1 // pred_region
      %21 = vsyncadd [#allocation4], 0
      %s22 = sshll.u32 %s2, 4
      %s23 = int_to_ptr.hbm [resolvable:$true] %s22
      %s24 = sshll.u32 [#allocation3], 4
      %s25 = int_to_ptr.vmem [resolvable:$true] %s24
      %30 = dma.hbm_to_vmem [thread:$0]  %s23, 4096, %s25, [#allocation4], 256, 256, 16
    $region13: #{rnn_forward.1} parent=1 // pred_fallthru
      _
    // Predicated region
    $region14: #{rnn_forward.1} parent=1 // pred_check
      _
    $region15: #{rnn_forward.1} parent=1 // pred_check_branch
      %32 = sbr.rel (0) target = $region17
    $region16: #{rnn_forward.1} parent=1 // pred_region
      _
    $region17: #{rnn_forward.1} parent=1 // pred_fallthru
      _
    // Predicated region
    $region18: #{rnn_forward.1} parent=1 // pred_check
      _
    $region19: #{rnn_forward.1} parent=1 // pred_check_branch
      %34 = sbr.rel (0) target = $region21
    $region20: #{rnn_forward.1} parent=1 // pred_region
      _
    $region21: #{rnn_forward.1} parent=1 // pred_fallthru
      _
    // Predicated region
    $region22: #{rnn_forward.1} parent=1 // pred_check
      _
    $region23: #{rnn_forward.1} parent=1 // pred_check_branch
      %36 = sbr.rel (0) target = $region25
    $region24: #{rnn_forward.1} parent=1 // pred_region
      _
    $region25: #{rnn_forward.1} parent=1 // pred_fallthru
      _
    // Predicated region
    $region26: #{rnn_forward.1} parent=1 // pred_check
      _
    $region27: #{rnn_forward.1} parent=1 // pred_check_branch
      %38 = sbr.rel (0) target = $region29
    $region28: #{rnn_forward.1} parent=1 // pred_region
      _
    $region29: #{rnn_forward.1} parent=1 // pred_fallthru
      _
    // Predicated region
    $region30: #{rnn_forward.1} parent=1 // pred_check
      _
    $region31: #{rnn_forward.1} parent=1 // pred_check_branch
      %40 = sbr.rel (0) target = $region33
    $region32: #{rnn_forward.1} parent=1 // pred_region
      _
    $region33: #{rnn_forward.1} parent=1 // pred_fallthru
      _
    // Predicated region
    $region34: #{rnn_forward.1} parent=1 // pred_check
      _
    $region35: #{rnn_forward.1} parent=1 // pred_check_branch
      %42 = sbr.rel (0) target = $region37
    $region36: #{rnn_forward.1} parent=1 // pred_region
      %44 = dma.done [#allocation4], 4096
    $region37: #{rnn_forward.1} parent=1 // pred_fallthru
      _
    %v46 = vld [vmem:[%s0] sm:$0xf]
    %v47 = vld [vmem:[%s0 + $0x4] sm:$0xf]
    %v48 = vld [vmem:[%s0 + $0x8] sm:$0xf]
    %v49 = vld [vmem:[%s0 + $0xc] sm:$0xf]
    %v50 = vld [vmem:[%s0 + $0x10] sm:$0xf]
    %v51 = vld [vmem:[%s0 + $0x14] sm:$0xf]
    %v52 = vld [vmem:[%s0 + $0x18] sm:$0xf]
    %v53 = vld [vmem:[%s0 + $0x1c] sm:$0xf]
    %v54 = vld [vmem:[%s1] sm:$0xff]
    %v55 = vld [vmem:[%s1 + $0x8] sm:$0xff]
    %v56 = vld [vmem:[%s1 + $0x10] sm:$0xff]
    %v57 = vld [vmem:[%s1 + $0x18] sm:$0xff]
    %v58 = vld [vmem:[%s1 + $0x20] sm:$0xff]
    %v59 = vld [vmem:[%s1 + $0x28] sm:$0xff]
    %v60 = vld [vmem:[%s1 + $0x30] sm:$0xff]
    %v61 = vld [vmem:[%s1 + $0x38] sm:$0xff]
    %v62 = vld [vmem:[%s1 + $0x40] sm:$0xff]
    %v63 = vld [vmem:[%s1 + $0x48] sm:$0xff]
    %v64 = vld [vmem:[%s1 + $0x50] sm:$0xff]
    %v65 = vld [vmem:[%s1 + $0x58] sm:$0xff]
    %v66 = vld [vmem:[%s1 + $0x60] sm:$0xff]
    %v67 = vld [vmem:[%s1 + $0x68] sm:$0xff]
    %v68 = vld [vmem:[%s1 + $0x70] sm:$0xff]
    %v69 = vld [vmem:[%s1 + $0x78] sm:$0xff]
    %v70 = vld [vmem:[%s1 + $0x80] sm:$0xff]
    %v71 = vld [vmem:[%s1 + $0x88] sm:$0xff]
    %v72 = vld [vmem:[%s1 + $0x90] sm:$0xff]
    %v73 = vld [vmem:[%s1 + $0x98] sm:$0xff]
    %v74 = vld [vmem:[%s1 + $0xa0] sm:$0xff]
    %v75 = vld [vmem:[%s1 + $0xa8] sm:$0xff]
    %v76 = vld [vmem:[%s1 + $0xb0] sm:$0xff]
    %v77 = vld [vmem:[%s1 + $0xb8] sm:$0xff]
    %v78 = vld [vmem:[%s1 + $0xc0] sm:$0xff]
    %v79 = vld [vmem:[%s1 + $0xc8] sm:$0xff]
    %v80 = vld [vmem:[%s1 + $0xd0] sm:$0xff]
    %v81 = vld [vmem:[%s1 + $0xd8] sm:$0xff]
    %v82 = vld [vmem:[%s1 + $0xe0] sm:$0xff]
    %v83 = vld [vmem:[%s1 + $0xe8] sm:$0xff]
    %v84 = vld [vmem:[%s1 + $0xf0] sm:$0xff]
    %v85 = vld [vmem:[%s1 + $0xf8] sm:$0xff]
    %v86 = vld [vmem:[%s3] sm:$0xf]
    %v88 = vperm.slane %v86, 0
    %v89 = vperm.slane %v86, 1
    %v90 = vperm.slane %v86, 2
    %v91 = vperm.slane %v86, 3
    %v104 = vunpack.c.l.b16 %v46
    %v105 = vunpack.c.l.b16 %v47
    %v106 = vunpack.c.l.b16 %v48
    %v107 = vunpack.c.l.b16 %v49
    %v108 = vunpack.c.l.b16 %v50
    %v109 = vunpack.c.l.b16 %v51
    %v110 = vunpack.c.l.b16 %v52
    %v111 = vunpack.c.l.b16 %v53
    %v112 = vpack.c.b16 %v105, %v104
    %v113 = vpack.c.b16 %v107, %v106
    %v114 = vpack.c.b16 %v109, %v108
    %v115 = vpack.c.b16 %v111, %v110
    %v152 = vunpack.c.l.b16 %v54
    %v153 = vunpack.c.h.b16 %v54
    %v154 = vunpack.c.l.b16 %v55
    %v155 = vunpack.c.h.b16 %v55
    %v156 = vunpack.c.l.b16 %v56
    %v157 = vunpack.c.h.b16 %v56
    %v158 = vunpack.c.l.b16 %v57
    %v159 = vunpack.c.h.b16 %v57
    %v160 = vunpack.c.l.b16 %v58
    %v161 = vunpack.c.h.b16 %v58
    %v162 = vunpack.c.l.b16 %v59
    %v163 = vunpack.c.h.b16 %v59
    %v164 = vunpack.c.l.b16 %v60
    %v165 = vunpack.c.h.b16 %v60
    %v166 = vunpack.c.l.b16 %v61
    %v167 = vunpack.c.h.b16 %v61
    %v168 = vunpack.c.l.b16 %v62
    %v169 = vunpack.c.h.b16 %v62
    %v170 = vunpack.c.l.b16 %v63
    %v171 = vunpack.c.h.b16 %v63
    %v172 = vunpack.c.l.b16 %v64
    %v173 = vunpack.c.h.b16 %v64
    %v174 = vunpack.c.l.b16 %v65
    %v175 = vunpack.c.h.b16 %v65
    %v176 = vunpack.c.l.b16 %v66
    %v177 = vunpack.c.h.b16 %v66
    %v178 = vunpack.c.l.b16 %v67
    %v179 = vunpack.c.h.b16 %v67
    %v180 = vunpack.c.l.b16 %v68
    %v181 = vunpack.c.h.b16 %v68
    %v182 = vunpack.c.l.b16 %v69
    %v183 = vunpack.c.h.b16 %v69
    %v184 = vunpack.c.l.b16 %v70
    %v185 = vunpack.c.h.b16 %v70
    %v186 = vunpack.c.l.b16 %v71
    %v187 = vunpack.c.h.b16 %v71
    %v188 = vunpack.c.l.b16 %v72
    %v189 = vunpack.c.h.b16 %v72
    %v190 = vunpack.c.l.b16 %v73
    %v191 = vunpack.c.h.b16 %v73
    %v192 = vunpack.c.l.b16 %v74
    %v193 = vunpack.c.h.b16 %v74
    %v194 = vunpack.c.l.b16 %v75
    %v195 = vunpack.c.h.b16 %v75
    %v196 = vunpack.c.l.b16 %v76
    %v197 = vunpack.c.h.b16 %v76
    %v198 = vunpack.c.l.b16 %v77
    %v199 = vunpack.c.h.b16 %v77
    %v200 = vunpack.c.l.b16 %v78
    %v201 = vunpack.c.h.b16 %v78
    %v202 = vunpack.c.l.b16 %v79
    %v203 = vunpack.c.h.b16 %v79
    %v204 = vunpack.c.l.b16 %v80
    %v205 = vunpack.c.h.b16 %v80
    %v206 = vunpack.c.l.b16 %v81
    %v207 = vunpack.c.h.b16 %v81
    %v208 = vunpack.c.l.b16 %v82
    %v209 = vunpack.c.h.b16 %v82
    %v210 = vunpack.c.l.b16 %v83
    %v211 = vunpack.c.h.b16 %v83
    %v212 = vunpack.c.l.b16 %v84
    %v213 = vunpack.c.h.b16 %v84
    %v214 = vunpack.c.l.b16 %v85
    %v215 = vunpack.c.h.b16 %v85
    %v216 = vpack.c.b16 %v156, %v152
    %v217 = vpack.c.b16 %v157, %v153
    %v218 = vpack.c.b16 %v158, %v154
    %v219 = vpack.c.b16 %v159, %v155
    %v220 = vpack.c.b16 %v164, %v160
    %v221 = vpack.c.b16 %v165, %v161
    %v222 = vpack.c.b16 %v166, %v162
    %v223 = vpack.c.b16 %v167, %v163
    %v224 = vpack.c.b16 %v172, %v168
    %v225 = vpack.c.b16 %v173, %v169
    %v226 = vpack.c.b16 %v174, %v170
    %v227 = vpack.c.b16 %v175, %v171
    %v228 = vpack.c.b16 %v180, %v176
    %v229 = vpack.c.b16 %v181, %v177
    %v230 = vpack.c.b16 %v182, %v178
    %v231 = vpack.c.b16 %v183, %v179
    %v232 = vpack.c.b16 %v188, %v184
    %v233 = vpack.c.b16 %v189, %v185
    %v234 = vpack.c.b16 %v190, %v186
    %v235 = vpack.c.b16 %v191, %v187
    %v236 = vpack.c.b16 %v196, %v192
    %v237 = vpack.c.b16 %v197, %v193
    %v238 = vpack.c.b16 %v198, %v194
    %v239 = vpack.c.b16 %v199, %v195
    %v240 = vpack.c.b16 %v204, %v200
    %v241 = vpack.c.b16 %v205, %v201
    %v242 = vpack.c.b16 %v206, %v202
    %v243 = vpack.c.b16 %v207, %v203
    %v244 = vpack.c.b16 %v212, %v208
    %v245 = vpack.c.b16 %v213, %v209
    %v246 = vpack.c.b16 %v214, %v210
    %v247 = vpack.c.b16 %v215, %v211
    %280 = vmatpush.bf16.msra.mxu0 %v244
    %281 = vmatpush.bf16.msra.mxu0 %v240
    %282 = vmatpush.bf16.msra.mxu0 %v236
    %283 = vmatpush.bf16.msra.mxu0 %v232
    %284 = vmatpush.bf16.msra.mxu0 %v228
    %285 = vmatpush.bf16.msra.mxu0 %v224
    %286 = vmatpush.bf16.msra.mxu0 %v220
    %287 = vmatpush.bf16.msra.mxu0 %v216
    %288 = vmatmul.bf16.gmra.mxu0 %v112
    %v289 = vpop.f32.mrf.mxu0
    %v290 = vadd.f32 %v88, %v289
    %v291 = vpop.f32.mrf.mxu0
    %v292 = vadd.f32 %v88, %v291
    %293 = vmatmul.bf16.gmra.mxu0 %v113
    %v294 = vpop.f32.mrf.mxu0
    %v295 = vadd.f32 %v88, %v294
    %v296 = vpop.f32.mrf.mxu0
    %v297 = vadd.f32 %v88, %v296
    %298 = vmatmul.bf16.gmra.mxu0 %v114
    %v299 = vpop.f32.mrf.mxu0
    %v300 = vadd.f32 %v88, %v299
    %v301 = vpop.f32.mrf.mxu0
    %v302 = vadd.f32 %v88, %v301
    %303 = vmatmul.bf16.gmra.mxu0 %v115
    %v304 = vpop.f32.mrf.mxu0
    %v305 = vadd.f32 %v88, %v304
    %v306 = vpop.f32.mrf.mxu0
    %v307 = vadd.f32 %v88, %v306
    %308 = vdwg.mxu0
    %309 = vmatpush.bf16.msra.mxu0 %v245
    %310 = vmatpush.bf16.msra.mxu0 %v241
    %311 = vmatpush.bf16.msra.mxu0 %v237
    %312 = vmatpush.bf16.msra.mxu0 %v233
    %313 = vmatpush.bf16.msra.mxu0 %v229
    %314 = vmatpush.bf16.msra.mxu0 %v225
    %315 = vmatpush.bf16.msra.mxu0 %v221
    %316 = vmatpush.bf16.msra.mxu0 %v217
    %317 = vmatmul.bf16.gmra.mxu0 %v112
    %v318 = vpop.f32.mrf.mxu0
    %v319 = vadd.f32 %v89, %v318
    %v320 = vpop.f32.mrf.mxu0
    %v321 = vadd.f32 %v89, %v320
    %322 = vmatmul.bf16.gmra.mxu0 %v113
    %v323 = vpop.f32.mrf.mxu0
    %v324 = vadd.f32 %v89, %v323
    %v325 = vpop.f32.mrf.mxu0
    %v326 = vadd.f32 %v89, %v325
    %327 = vmatmul.bf16.gmra.mxu0 %v114
    %v328 = vpop.f32.mrf.mxu0
    %v329 = vadd.f32 %v89, %v328
    %v330 = vpop.f32.mrf.mxu0
    %v331 = vadd.f32 %v89, %v330
    %332 = vmatmul.bf16.gmra.mxu0 %v115
    %v333 = vpop.f32.mrf.mxu0
    %v334 = vadd.f32 %v89, %v333
    %v335 = vpop.f32.mrf.mxu0
    %v336 = vadd.f32 %v89, %v335
    %337 = vdwg.mxu0
    %338 = vmatpush.bf16.msra.mxu0 %v246
    %339 = vmatpush.bf16.msra.mxu0 %v242
    %340 = vmatpush.bf16.msra.mxu0 %v238
    %341 = vmatpush.bf16.msra.mxu0 %v234
    %342 = vmatpush.bf16.msra.mxu0 %v230
    %343 = vmatpush.bf16.msra.mxu0 %v226
    %344 = vmatpush.bf16.msra.mxu0 %v222
    %345 = vmatpush.bf16.msra.mxu0 %v218
    %346 = vmatmul.bf16.gmra.mxu0 %v112
    %v347 = vpop.f32.mrf.mxu0
    %v348 = vadd.f32 %v90, %v347
    %v349 = vpop.f32.mrf.mxu0
    %v350 = vadd.f32 %v90, %v349
    %351 = vmatmul.bf16.gmra.mxu0 %v113
    %v352 = vpop.f32.mrf.mxu0
    %v353 = vadd.f32 %v90, %v352
    %v354 = vpop.f32.mrf.mxu0
    %v355 = vadd.f32 %v90, %v354
    %356 = vmatmul.bf16.gmra.mxu0 %v114
    %v357 = vpop.f32.mrf.mxu0
    %v358 = vadd.f32 %v90, %v357
    %v359 = vpop.f32.mrf.mxu0
    %v360 = vadd.f32 %v90, %v359
    %361 = vmatmul.bf16.gmra.mxu0 %v115
    %v362 = vpop.f32.mrf.mxu0
    %v363 = vadd.f32 %v90, %v362
    %v364 = vpop.f32.mrf.mxu0
    %v365 = vadd.f32 %v90, %v364
    %366 = vdwg.mxu0
    %367 = vmatpush.bf16.msra.mxu0 %v247
    %368 = vmatpush.bf16.msra.mxu0 %v243
    %369 = vmatpush.bf16.msra.mxu0 %v239
    %370 = vmatpush.bf16.msra.mxu0 %v235
    %371 = vmatpush.bf16.msra.mxu0 %v231
    %372 = vmatpush.bf16.msra.mxu0 %v227
    %373 = vmatpush.bf16.msra.mxu0 %v223
    %374 = vmatpush.bf16.msra.mxu0 %v219
    %375 = vmatmul.bf16.gmra.mxu0 %v112
    %v376 = vpop.f32.mrf.mxu0
    %v377 = vadd.f32 %v91, %v376
    %v378 = vpop.f32.mrf.mxu0
    %v379 = vadd.f32 %v91, %v378
    %380 = vmatmul.bf16.gmra.mxu0 %v113
    %v381 = vpop.f32.mrf.mxu0
    %v382 = vadd.f32 %v91, %v381
    %v383 = vpop.f32.mrf.mxu0
    %v384 = vadd.f32 %v91, %v383
    %385 = vmatmul.bf16.gmra.mxu0 %v114
    %v386 = vpop.f32.mrf.mxu0
    %v387 = vadd.f32 %v91, %v386
    %v388 = vpop.f32.mrf.mxu0
    %v389 = vadd.f32 %v91, %v388
    %390 = vmatmul.bf16.gmra.mxu0 %v115
    %v391 = vpop.f32.mrf.mxu0
    %v392 = vadd.f32 %v91, %v391
    %v393 = vpop.f32.mrf.mxu0
    %v394 = vadd.f32 %v91, %v393
    %395 = vdwg.mxu0
    %396 = vst [vmem:[#allocation2] sm:$0xff] %v290
    %397 = vst [vmem:[#allocation2 + $0x8] sm:$0xff] %v319
    %398 = vst [vmem:[#allocation2 + $0x10] sm:$0xff] %v348
    %399 = vst [vmem:[#allocation2 + $0x18] sm:$0xff] %v377
    %400 = vst [vmem:[#allocation2 + $0x20] sm:$0xff] %v292
    %401 = vst [vmem:[#allocation2 + $0x28] sm:$0xff] %v321
    %402 = vst [vmem:[#allocation2 + $0x30] sm:$0xff] %v350
    %403 = vst [vmem:[#allocation2 + $0x38] sm:$0xff] %v379
    %404 = vst [vmem:[#allocation2 + $0x40] sm:$0xff] %v295
    %405 = vst [vmem:[#allocation2 + $0x48] sm:$0xff] %v324
    %406 = vst [vmem:[#allocation2 + $0x50] sm:$0xff] %v353
    %407 = vst [vmem:[#allocation2 + $0x58] sm:$0xff] %v382
    %408 = vst [vmem:[#allocation2 + $0x60] sm:$0xff] %v297
    %409 = vst [vmem:[#allocation2 + $0x68] sm:$0xff] %v326
    %410 = vst [vmem:[#allocation2 + $0x70] sm:$0xff] %v355
    %411 = vst [vmem:[#allocation2 + $0x78] sm:$0xff] %v384
    %412 = vst [vmem:[#allocation2 + $0x80] sm:$0xff] %v300
    %413 = vst [vmem:[#allocation2 + $0x88] sm:$0xff] %v329
    %414 = vst [vmem:[#allocation2 + $0x90] sm:$0xff] %v358
    %415 = vst [vmem:[#allocation2 + $0x98] sm:$0xff] %v387
    %416 = vst [vmem:[#allocation2 + $0xa0] sm:$0xff] %v302
    %417 = vst [vmem:[#allocation2 + $0xa8] sm:$0xff] %v331
    %418 = vst [vmem:[#allocation2 + $0xb0] sm:$0xff] %v360
    %419 = vst [vmem:[#allocation2 + $0xb8] sm:$0xff] %v389
    %420 = vst [vmem:[#allocation2 + $0xc0] sm:$0xff] %v305
    %421 = vst [vmem:[#allocation2 + $0xc8] sm:$0xff] %v334
    %422 = vst [vmem:[#allocation2 + $0xd0] sm:$0xff] %v363
    %423 = vst [vmem:[#allocation2 + $0xd8] sm:$0xff] %v392
    %424 = vst [vmem:[#allocation2 + $0xe0] sm:$0xff] %v307
    %425 = vst [vmem:[#allocation2 + $0xe8] sm:$0xff] %v336
    %426 = vst [vmem:[#allocation2 + $0xf0] sm:$0xff] %v365
    %427 = vst [vmem:[#allocation2 + $0xf8] sm:$0xff] %v394
    %s428 = smul.u32 0, 4
    %s429 = smul.addr %s428, 8
    %s430 = scalar_lea.vmem [#allocation2], %s429
    %v431 = vld [vmem:[%s430] sm:$0xff]
    %v432 = vld [vmem:[%s430 + $0x8] sm:$0xff]
    %v433 = vld [vmem:[%s430 + $0x10] sm:$0xff]
    %v434 = vld [vmem:[%s430 + $0x18] sm:$0xff]
    %v435 = vld [vmem:[#allocation3] sm:$0xff]
    %v436 = vld [vmem:[#allocation3 + $0x8] sm:$0xff]
    %v437 = vld [vmem:[#allocation3 + $0x10] sm:$0xff]
    %v438 = vld [vmem:[#allocation3 + $0x18] sm:$0xff]
    %v439 = vld [vmem:[#allocation3 + $0x20] sm:$0xff]
    %v440 = vld [vmem:[#allocation3 + $0x28] sm:$0xff]
    %v441 = vld [vmem:[#allocation3 + $0x30] sm:$0xff]
    %v442 = vld [vmem:[#allocation3 + $0x38] sm:$0xff]
    %v443 = vld [vmem:[#allocation3 + $0x40] sm:$0xff]
    %v444 = vld [vmem:[#allocation3 + $0x48] sm:$0xff]
    %v445 = vld [vmem:[#allocation3 + $0x50] sm:$0xff]
    %v446 = vld [vmem:[#allocation3 + $0x58] sm:$0xff]
    %v447 = vld [vmem:[#allocation3 + $0x60] sm:$0xff]
    %v448 = vld [vmem:[#allocation3 + $0x68] sm:$0xff]
    %v449 = vld [vmem:[#allocation3 + $0x70] sm:$0xff]
    %v450 = vld [vmem:[#allocation3 + $0x78] sm:$0xff]
    %v451 = vld [vmem:[#allocation3 + $0x80] sm:$0xff]
    %v452 = vld [vmem:[#allocation3 + $0x88] sm:$0xff]
    %v453 = vld [vmem:[#allocation3 + $0x90] sm:$0xff]
    %v454 = vld [vmem:[#allocation3 + $0x98] sm:$0xff]
    %v455 = vld [vmem:[#allocation3 + $0xa0] sm:$0xff]
    %v456 = vld [vmem:[#allocation3 + $0xa8] sm:$0xff]
    %v457 = vld [vmem:[#allocation3 + $0xb0] sm:$0xff]
    %v458 = vld [vmem:[#allocation3 + $0xb8] sm:$0xff]
    %v459 = vld [vmem:[#allocation3 + $0xc0] sm:$0xff]
    %v460 = vld [vmem:[#allocation3 + $0xc8] sm:$0xff]
    %v461 = vld [vmem:[#allocation3 + $0xd0] sm:$0xff]
    %v462 = vld [vmem:[#allocation3 + $0xd8] sm:$0xff]
    %v463 = vld [vmem:[#allocation3 + $0xe0] sm:$0xff]
    %v464 = vld [vmem:[#allocation3 + $0xe8] sm:$0xff]
    %v465 = vld [vmem:[#allocation3 + $0xf0] sm:$0xff]
    %v466 = vld [vmem:[#allocation3 + $0xf8] sm:$0xff]
    %v499 = vunpack.c.l.b16 %v435
    %v500 = vunpack.c.h.b16 %v435
    %v501 = vunpack.c.l.b16 %v436
    %v502 = vunpack.c.h.b16 %v436
    %v503 = vunpack.c.l.b16 %v437
    %v504 = vunpack.c.h.b16 %v437
    %v505 = vunpack.c.l.b16 %v438
    %v506 = vunpack.c.h.b16 %v438
    %v507 = vunpack.c.l.b16 %v439
    %v508 = vunpack.c.h.b16 %v439
    %v509 = vunpack.c.l.b16 %v440
    %v510 = vunpack.c.h.b16 %v440
    %v511 = vunpack.c.l.b16 %v441
    %v512 = vunpack.c.h.b16 %v441
    %v513 = vunpack.c.l.b16 %v442
    %v514 = vunpack.c.h.b16 %v442
    %v515 = vunpack.c.l.b16 %v443
    %v516 = vunpack.c.h.b16 %v443
    %v517 = vunpack.c.l.b16 %v444
    %v518 = vunpack.c.h.b16 %v444
    %v519 = vunpack.c.l.b16 %v445
    %v520 = vunpack.c.h.b16 %v445
    %v521 = vunpack.c.l.b16 %v446
    %v522 = vunpack.c.h.b16 %v446
    %v523 = vunpack.c.l.b16 %v447
    %v524 = vunpack.c.h.b16 %v447
    %v525 = vunpack.c.l.b16 %v448
    %v526 = vunpack.c.h.b16 %v448
    %v527 = vunpack.c.l.b16 %v449
    %v528 = vunpack.c.h.b16 %v449
    %v529 = vunpack.c.l.b16 %v450
    %v530 = vunpack.c.h.b16 %v450
    %v531 = vunpack.c.l.b16 %v451
    %v532 = vunpack.c.h.b16 %v451
    %v533 = vunpack.c.l.b16 %v452
    %v534 = vunpack.c.h.b16 %v452
    %v535 = vunpack.c.l.b16 %v453
    %v536 = vunpack.c.h.b16 %v453
    %v537 = vunpack.c.l.b16 %v454
    %v538 = vunpack.c.h.b16 %v454
    %v539 = vunpack.c.l.b16 %v455
    %v540 = vunpack.c.h.b16 %v455
    %v541 = vunpack.c.l.b16 %v456
    %v542 = vunpack.c.h.b16 %v456
    %v543 = vunpack.c.l.b16 %v457
    %v544 = vunpack.c.h.b16 %v457
    %v545 = vunpack.c.l.b16 %v458
    %v546 = vunpack.c.h.b16 %v458
    %v547 = vunpack.c.l.b16 %v459
    %v548 = vunpack.c.h.b16 %v459
    %v549 = vunpack.c.l.b16 %v460
    %v550 = vunpack.c.h.b16 %v460
    %v551 = vunpack.c.l.b16 %v461
    %v552 = vunpack.c.h.b16 %v461
    %v553 = vunpack.c.l.b16 %v462
    %v554 = vunpack.c.h.b16 %v462
    %v555 = vunpack.c.l.b16 %v463
    %v556 = vunpack.c.h.b16 %v463
    %v557 = vunpack.c.l.b16 %v464
    %v558 = vunpack.c.h.b16 %v464
    %v559 = vunpack.c.l.b16 %v465
    %v560 = vunpack.c.h.b16 %v465
    %v561 = vunpack.c.l.b16 %v466
    %v562 = vunpack.c.h.b16 %v466
    %v563 = vpack.c.b16 %v503, %v499
    %v564 = vpack.c.b16 %v504, %v500
    %v565 = vpack.c.b16 %v505, %v501
    %v566 = vpack.c.b16 %v506, %v502
    %v567 = vpack.c.b16 %v511, %v507
    %v568 = vpack.c.b16 %v512, %v508
    %v569 = vpack.c.b16 %v513, %v509
    %v570 = vpack.c.b16 %v514, %v510
    %v571 = vpack.c.b16 %v519, %v515
    %v572 = vpack.c.b16 %v520, %v516
    %v573 = vpack.c.b16 %v521, %v517
    %v574 = vpack.c.b16 %v522, %v518
    %v575 = vpack.c.b16 %v527, %v523
    %v576 = vpack.c.b16 %v528, %v524
    %v577 = vpack.c.b16 %v529, %v525
    %v578 = vpack.c.b16 %v530, %v526
    %v579 = vpack.c.b16 %v535, %v531
    %v580 = vpack.c.b16 %v536, %v532
    %v581 = vpack.c.b16 %v537, %v533
    %v582 = vpack.c.b16 %v538, %v534
    %v583 = vpack.c.b16 %v543, %v539
    %v584 = vpack.c.b16 %v544, %v540
    %v585 = vpack.c.b16 %v545, %v541
    %v586 = vpack.c.b16 %v546, %v542
    %v587 = vpack.c.b16 %v551, %v547
    %v588 = vpack.c.b16 %v552, %v548
    %v589 = vpack.c.b16 %v553, %v549
    %v590 = vpack.c.b16 %v554, %v550
    %v591 = vpack.c.b16 %v559, %v555
    %v592 = vpack.c.b16 %v560, %v556
    %v593 = vpack.c.b16 %v561, %v557
    %v594 = vpack.c.b16 %v562, %v558
    %627 = vmatpush.bf16.msra.mxu0 %v591
    %628 = vmatpush.bf16.msra.mxu0 %v587
    %629 = vmatpush.bf16.msra.mxu0 %v583
    %630 = vmatpush.bf16.msra.mxu0 %v579
    %631 = vmatpush.bf16.msra.mxu0 %v575
    %632 = vmatpush.bf16.msra.mxu0 %v571
    %633 = vmatpush.bf16.msra.mxu0 %v567
    %634 = vmatpush.bf16.msra.mxu0 %v563
    %635 = vmatmul.bf16.gmra.mxu0 0
    %v636 = vpop.f32.mrf.mxu0
    %v637 = vadd.f32 0.0, %v636
    %v638 = vpop.f32.mrf.mxu0
    %639 = vdwg.mxu0
    %640 = vmatpush.bf16.msra.mxu0 %v592
    %641 = vmatpush.bf16.msra.mxu0 %v588
    %642 = vmatpush.bf16.msra.mxu0 %v584
    %643 = vmatpush.bf16.msra.mxu0 %v580
    %644 = vmatpush.bf16.msra.mxu0 %v576
    %645 = vmatpush.bf16.msra.mxu0 %v572
    %646 = vmatpush.bf16.msra.mxu0 %v568
    %647 = vmatpush.bf16.msra.mxu0 %v564
    %648 = vmatmul.bf16.gmra.mxu0 0
    %v649 = vpop.f32.mrf.mxu0
    %v650 = vadd.f32 0.0, %v649
    %v651 = vpop.f32.mrf.mxu0
    %652 = vdwg.mxu0
    %653 = vmatpush.bf16.msra.mxu0 %v593
    %654 = vmatpush.bf16.msra.mxu0 %v589
    %655 = vmatpush.bf16.msra.mxu0 %v585
    %656 = vmatpush.bf16.msra.mxu0 %v581
    %657 = vmatpush.bf16.msra.mxu0 %v577
    %658 = vmatpush.bf16.msra.mxu0 %v573
    %659 = vmatpush.bf16.msra.mxu0 %v569
    %660 = vmatpush.bf16.msra.mxu0 %v565
    %661 = vmatmul.bf16.gmra.mxu0 0
    %v662 = vpop.f32.mrf.mxu0
    %v663 = vadd.f32 0.0, %v662
    %v664 = vpop.f32.mrf.mxu0
    %665 = vdwg.mxu0
    %666 = vmatpush.bf16.msra.mxu0 %v594
    %667 = vmatpush.bf16.msra.mxu0 %v590
    %668 = vmatpush.bf16.msra.mxu0 %v586
    %669 = vmatpush.bf16.msra.mxu0 %v582
    %670 = vmatpush.bf16.msra.mxu0 %v578
    %671 = vmatpush.bf16.msra.mxu0 %v574
    %672 = vmatpush.bf16.msra.mxu0 %v570
    %673 = vmatpush.bf16.msra.mxu0 %v566
    %674 = vmatmul.bf16.gmra.mxu0 0
    %v675 = vpop.f32.mrf.mxu0
    %v676 = vadd.f32 0.0, %v675
    %v677 = vpop.f32.mrf.mxu0
    %678 = vdwg.mxu0
    %v679 = vadd.f32 %v431, %v637
    %v680 = vadd.f32 %v432, %v650
    %v681 = vadd.f32 %v433, %v663
    %v682 = vadd.f32 %v434, %v676
    %v683 = vmul.f32 %v679, 0.5
    %v684 = vtanh.pop %v683
    %v685 = vmul.f32 %v684, 0.5
    %v686 = vadd.f32 %v685, 0.5
    %v687 = vmul.f32 %v680, 0.5
    %v688 = vtanh.pop %v687
    %v689 = vmul.f32 %v688, 0.5
    %v690 = vadd.f32 %v689, 0.5
    %v691 = vtanh.pop %v681
    %v692 = vmul.f32 %v682, 0.5
    %v693 = vtanh.pop %v692
    %v694 = vmul.f32 %v693, 0.5
    %v695 = vadd.f32 %v694, 0.5
    %v696 = vmul.f32 %v690, 0.0
    %v697 = vmul.f32 %v686, %v691
    %v698 = vadd.f32 %v696, %v697
    %v699 = vtanh.pop %v698
    %v700 = vmul.f32 %v695, %v699
    %s701 = smul.u32 1, 4
    %s702 = smul.addr %s701, 8
    %s703 = scalar_lea.vmem [#allocation2], %s702
    %v704 = vld [vmem:[%s703] sm:$0xff]
    %v705 = vld [vmem:[%s703 + $0x8] sm:$0xff]
    %v706 = vld [vmem:[%s703 + $0x10] sm:$0xff]
    %v707 = vld [vmem:[%s703 + $0x18] sm:$0xff]
    %v708 = vpack.c.bf16 %v700, %v700
    %709 = vmatpush.bf16.msra.mxu0 %v591
    %710 = vmatpush.bf16.msra.mxu0 %v587
    %711 = vmatpush.bf16.msra.mxu0 %v583
    %712 = vmatpush.bf16.msra.mxu0 %v579
    %713 = vmatpush.bf16.msra.mxu0 %v575
    %714 = vmatpush.bf16.msra.mxu0 %v571
    %715 = vmatpush.bf16.msra.mxu0 %v567
    %716 = vmatpush.bf16.msra.mxu0 %v563
    %717 = vmatmul.bf16.gmra.mxu0 %v708
    %v718 = vpop.f32.mrf.mxu0
    %v719 = vadd.f32 0.0, %v718
    %v720 = vpop.f32.mrf.mxu0
    %721 = vdwg.mxu0
    %722 = vmatpush.bf16.msra.mxu0 %v592
    %723 = vmatpush.bf16.msra.mxu0 %v588
    %724 = vmatpush.bf16.msra.mxu0 %v584
    %725 = vmatpush.bf16.msra.mxu0 %v580
    %726 = vmatpush.bf16.msra.mxu0 %v576
    %727 = vmatpush.bf16.msra.mxu0 %v572
    %728 = vmatpush.bf16.msra.mxu0 %v568
    %729 = vmatpush.bf16.msra.mxu0 %v564
    %730 = vmatmul.bf16.gmra.mxu0 %v708
    %v731 = vpop.f32.mrf.mxu0
    %v732 = vadd.f32 0.0, %v731
    %v733 = vpop.f32.mrf.mxu0
    %734 = vdwg.mxu0
    %735 = vmatpush.bf16.msra.mxu0 %v593
    %736 = vmatpush.bf16.msra.mxu0 %v589
    %737 = vmatpush.bf16.msra.mxu0 %v585
    %738 = vmatpush.bf16.msra.mxu0 %v581
    %739 = vmatpush.bf16.msra.mxu0 %v577
    %740 = vmatpush.bf16.msra.mxu0 %v573
    %741 = vmatpush.bf16.msra.mxu0 %v569
    %742 = vmatpush.bf16.msra.mxu0 %v565
    %743 = vmatmul.bf16.gmra.mxu0 %v708
    %v744 = vpop.f32.mrf.mxu0
    %v745 = vadd.f32 0.0, %v744
    %v746 = vpop.f32.mrf.mxu0
    %747 = vdwg.mxu0
    %748 = vmatpush.bf16.msra.mxu0 %v594
    %749 = vmatpush.bf16.msra.mxu0 %v590
    %750 = vmatpush.bf16.msra.mxu0 %v586
    %751 = vmatpush.bf16.msra.mxu0 %v582
    %752 = vmatpush.bf16.msra.mxu0 %v578
    %753 = vmatpush.bf16.msra.mxu0 %v574
    %754 = vmatpush.bf16.msra.mxu0 %v570
    %755 = vmatpush.bf16.msra.mxu0 %v566
    %756 = vmatmul.bf16.gmra.mxu0 %v708
    %v757 = vpop.f32.mrf.mxu0
    %v758 = vadd.f32 0.0, %v757
    %v759 = vpop.f32.mrf.mxu0
    %760 = vdwg.mxu0
    %v761 = vadd.f32 %v704, %v719
    %v762 = vadd.f32 %v705, %v732
    %v763 = vadd.f32 %v706, %v745
    %v764 = vadd.f32 %v707, %v758
    %v765 = vmul.f32 %v761, 0.5
    %v766 = vtanh.pop %v765
    %v767 = vmul.f32 %v766, 0.5
    %v768 = vadd.f32 %v767, 0.5
    %v769 = vmul.f32 %v762, 0.5
    %v770 = vtanh.pop %v769
    %v771 = vmul.f32 %v770, 0.5
    %v772 = vadd.f32 %v771, 0.5
    %v773 = vtanh.pop %v763
    %v774 = vmul.f32 %v764, 0.5
    %v775 = vtanh.pop %v774
    %v776 = vmul.f32 %v775, 0.5
    %v777 = vadd.f32 %v776, 0.5
    %v778 = vmul.f32 %v772, %v698
    %v779 = vmul.f32 %v768, %v773
    %v780 = vadd.f32 %v778, %v779
    %v781 = vtanh.pop %v780
    %v782 = vmul.f32 %v777, %v781
    %s783 = smul.u32 2, 4
    %s784 = smul.addr %s783, 8
    %s785 = scalar_lea.vmem [#allocation2], %s784
    %v786 = vld [vmem:[%s785] sm:$0xff]
    %v787 = vld [vmem:[%s785 + $0x8] sm:$0xff]
    %v788 = vld [vmem:[%s785 + $0x10] sm:$0xff]
    %v789 = vld [vmem:[%s785 + $0x18] sm:$0xff]
    %v790 = vpack.c.bf16 %v782, %v782
    %791 = vmatpush.bf16.msra.mxu0 %v591
    %792 = vmatpush.bf16.msra.mxu0 %v587
    %793 = vmatpush.bf16.msra.mxu0 %v583
    %794 = vmatpush.bf16.msra.mxu0 %v579
    %795 = vmatpush.bf16.msra.mxu0 %v575
    %796 = vmatpush.bf16.msra.mxu0 %v571
    %797 = vmatpush.bf16.msra.mxu0 %v567
    %798 = vmatpush.bf16.msra.mxu0 %v563
    %799 = vmatmul.bf16.gmra.mxu0 %v790
    %v800 = vpop.f32.mrf.mxu0
    %v801 = vadd.f32 0.0, %v800
    %v802 = vpop.f32.mrf.mxu0
    %803 = vdwg.mxu0
    %804 = vmatpush.bf16.msra.mxu0 %v592
    %805 = vmatpush.bf16.msra.mxu0 %v588
    %806 = vmatpush.bf16.msra.mxu0 %v584
    %807 = vmatpush.bf16.msra.mxu0 %v580
    %808 = vmatpush.bf16.msra.mxu0 %v576
    %809 = vmatpush.bf16.msra.mxu0 %v572
    %810 = vmatpush.bf16.msra.mxu0 %v568
    %811 = vmatpush.bf16.msra.mxu0 %v564
    %812 = vmatmul.bf16.gmra.mxu0 %v790
    %v813 = vpop.f32.mrf.mxu0
    %v814 = vadd.f32 0.0, %v813
    %v815 = vpop.f32.mrf.mxu0
    %816 = vdwg.mxu0
    %817 = vmatpush.bf16.msra.mxu0 %v593
    %818 = vmatpush.bf16.msra.mxu0 %v589
    %819 = vmatpush.bf16.msra.mxu0 %v585
    %820 = vmatpush.bf16.msra.mxu0 %v581
    %821 = vmatpush.bf16.msra.mxu0 %v577
    %822 = vmatpush.bf16.msra.mxu0 %v573
    %823 = vmatpush.bf16.msra.mxu0 %v569
    %824 = vmatpush.bf16.msra.mxu0 %v565
    %825 = vmatmul.bf16.gmra.mxu0 %v790
    %v826 = vpop.f32.mrf.mxu0
    %v827 = vadd.f32 0.0, %v826
    %v828 = vpop.f32.mrf.mxu0
    %829 = vdwg.mxu0
    %830 = vmatpush.bf16.msra.mxu0 %v594
    %831 = vmatpush.bf16.msra.mxu0 %v590
    %832 = vmatpush.bf16.msra.mxu0 %v586
    %833 = vmatpush.bf16.msra.mxu0 %v582
    %834 = vmatpush.bf16.msra.mxu0 %v578
    %835 = vmatpush.bf16.msra.mxu0 %v574
    %836 = vmatpush.bf16.msra.mxu0 %v570
    %837 = vmatpush.bf16.msra.mxu0 %v566
    %838 = vmatmul.bf16.gmra.mxu0 %v790
    %v839 = vpop.f32.mrf.mxu0
    %v840 = vadd.f32 0.0, %v839
    %v841 = vpop.f32.mrf.mxu0
    %842 = vdwg.mxu0
    %v843 = vadd.f32 %v786, %v801
    %v844 = vadd.f32 %v787, %v814
    %v845 = vadd.f32 %v788, %v827
    %v846 = vadd.f32 %v789, %v840
    %v847 = vmul.f32 %v843, 0.5
    %v848 = vtanh.pop %v847
    %v849 = vmul.f32 %v848, 0.5
    %v850 = vadd.f32 %v849, 0.5
    %v851 = vmul.f32 %v844, 0.5
    %v852 = vtanh.pop %v851
    %v853 = vmul.f32 %v852, 0.5
    %v854 = vadd.f32 %v853, 0.5
    %v855 = vtanh.pop %v845
    %v856 = vmul.f32 %v846, 0.5
    %v857 = vtanh.pop %v856
    %v858 = vmul.f32 %v857, 0.5
    %v859 = vadd.f32 %v858, 0.5
    %v860 = vmul.f32 %v854, %v780
    %v861 = vmul.f32 %v850, %v855
    %v862 = vadd.f32 %v860, %v861
    %v863 = vtanh.pop %v862
    %v864 = vmul.f32 %v859, %v863
    %s865 = smul.u32 3, 4
    %s866 = smul.addr %s865, 8
    %s867 = scalar_lea.vmem [#allocation2], %s866
    %v868 = vld [vmem:[%s867] sm:$0xff]
    %v869 = vld [vmem:[%s867 + $0x8] sm:$0xff]
    %v870 = vld [vmem:[%s867 + $0x10] sm:$0xff]
    %v871 = vld [vmem:[%s867 + $0x18] sm:$0xff]
    %v872 = vpack.c.bf16 %v864, %v864
    %873 = vmatpush.bf16.msra.mxu0 %v591
    %874 = vmatpush.bf16.msra.mxu0 %v587
    %875 = vmatpush.bf16.msra.mxu0 %v583
    %876 = vmatpush.bf16.msra.mxu0 %v579
    %877 = vmatpush.bf16.msra.mxu0 %v575
    %878 = vmatpush.bf16.msra.mxu0 %v571
    %879 = vmatpush.bf16.msra.mxu0 %v567
    %880 = vmatpush.bf16.msra.mxu0 %v563
    %881 = vmatmul.bf16.gmra.mxu0 %v872
    %v882 = vpop.f32.mrf.mxu0
    %v883 = vadd.f32 0.0, %v882
    %v884 = vpop.f32.mrf.mxu0
    %885 = vdwg.mxu0
    %886 = vmatpush.bf16.msra.mxu0 %v592
    %887 = vmatpush.bf16.msra.mxu0 %v588
    %888 = vmatpush.bf16.msra.mxu0 %v584
    %889 = vmatpush.bf16.msra.mxu0 %v580
    %890 = vmatpush.bf16.msra.mxu0 %v576
    %891 = vmatpush.bf16.msra.mxu0 %v572
    %892 = vmatpush.bf16.msra.mxu0 %v568
    %893 = vmatpush.bf16.msra.mxu0 %v564
    %894 = vmatmul.bf16.gmra.mxu0 %v872
    %v895 = vpop.f32.mrf.mxu0
    %v896 = vadd.f32 0.0, %v895
    %v897 = vpop.f32.mrf.mxu0
    %898 = vdwg.mxu0
    %899 = vmatpush.bf16.msra.mxu0 %v593
    %900 = vmatpush.bf16.msra.mxu0 %v589
    %901 = vmatpush.bf16.msra.mxu0 %v585
    %902 = vmatpush.bf16.msra.mxu0 %v581
    %903 = vmatpush.bf16.msra.mxu0 %v577
    %904 = vmatpush.bf16.msra.mxu0 %v573
    %905 = vmatpush.bf16.msra.mxu0 %v569
    %906 = vmatpush.bf16.msra.mxu0 %v565
    %907 = vmatmul.bf16.gmra.mxu0 %v872
    %v908 = vpop.f32.mrf.mxu0
    %v909 = vadd.f32 0.0, %v908
    %v910 = vpop.f32.mrf.mxu0
    %911 = vdwg.mxu0
    %912 = vmatpush.bf16.msra.mxu0 %v594
    %913 = vmatpush.bf16.msra.mxu0 %v590
    %914 = vmatpush.bf16.msra.mxu0 %v586
    %915 = vmatpush.bf16.msra.mxu0 %v582
    %916 = vmatpush.bf16.msra.mxu0 %v578
    %917 = vmatpush.bf16.msra.mxu0 %v574
    %918 = vmatpush.bf16.msra.mxu0 %v570
    %919 = vmatpush.bf16.msra.mxu0 %v566
    %920 = vmatmul.bf16.gmra.mxu0 %v872
    %v921 = vpop.f32.mrf.mxu0
    %v922 = vadd.f32 0.0, %v921
    %v923 = vpop.f32.mrf.mxu0
    %924 = vdwg.mxu0
    %v925 = vadd.f32 %v868, %v883
    %v926 = vadd.f32 %v869, %v896
    %v927 = vadd.f32 %v870, %v909
    %v928 = vadd.f32 %v871, %v922
    %v929 = vmul.f32 %v925, 0.5
    %v930 = vtanh.pop %v929
    %v931 = vmul.f32 %v930, 0.5
    %v932 = vadd.f32 %v931, 0.5
    %v933 = vmul.f32 %v926, 0.5
    %v934 = vtanh.pop %v933
    %v935 = vmul.f32 %v934, 0.5
    %v936 = vadd.f32 %v935, 0.5
    %v937 = vtanh.pop %v927
    %v938 = vmul.f32 %v928, 0.5
    %v939 = vtanh.pop %v938
    %v940 = vmul.f32 %v939, 0.5
    %v941 = vadd.f32 %v940, 0.5
    %v942 = vmul.f32 %v936, %v862
    %v943 = vmul.f32 %v932, %v937
    %v944 = vadd.f32 %v942, %v943
    %v945 = vtanh.pop %v944
    %v946 = vmul.f32 %v941, %v945
    %s947 = smul.u32 4, 4
    %s948 = smul.addr %s947, 8
    %s949 = scalar_lea.vmem [#allocation2], %s948
    %v950 = vld [vmem:[%s949] sm:$0xff]
    %v951 = vld [vmem:[%s949 + $0x8] sm:$0xff]
    %v952 = vld [vmem:[%s949 + $0x10] sm:$0xff]
    %v953 = vld [vmem:[%s949 + $0x18] sm:$0xff]
    %v954 = vpack.c.bf16 %v946, %v946
    %955 = vmatpush.bf16.msra.mxu0 %v591
    %956 = vmatpush.bf16.msra.mxu0 %v587
    %957 = vmatpush.bf16.msra.mxu0 %v583
    %958 = vmatpush.bf16.msra.mxu0 %v579
    %959 = vmatpush.bf16.msra.mxu0 %v575
    %960 = vmatpush.bf16.msra.mxu0 %v571
    %961 = vmatpush.bf16.msra.mxu0 %v567
    %962 = vmatpush.bf16.msra.mxu0 %v563
    %963 = vmatmul.bf16.gmra.mxu0 %v954
    %v964 = vpop.f32.mrf.mxu0
    %v965 = vadd.f32 0.0, %v964
    %v966 = vpop.f32.mrf.mxu0
    %967 = vdwg.mxu0
    %968 = vmatpush.bf16.msra.mxu0 %v592
    %969 = vmatpush.bf16.msra.mxu0 %v588
    %970 = vmatpush.bf16.msra.mxu0 %v584
    %971 = vmatpush.bf16.msra.mxu0 %v580
    %972 = vmatpush.bf16.msra.mxu0 %v576
    %973 = vmatpush.bf16.msra.mxu0 %v572
    %974 = vmatpush.bf16.msra.mxu0 %v568
    %975 = vmatpush.bf16.msra.mxu0 %v564
    %976 = vmatmul.bf16.gmra.mxu0 %v954
    %v977 = vpop.f32.mrf.mxu0
    %v978 = vadd.f32 0.0, %v977
    %v979 = vpop.f32.mrf.mxu0
    %980 = vdwg.mxu0
    %981 = vmatpush.bf16.msra.mxu0 %v593
    %982 = vmatpush.bf16.msra.mxu0 %v589
    %983 = vmatpush.bf16.msra.mxu0 %v585
    %984 = vmatpush.bf16.msra.mxu0 %v581
    %985 = vmatpush.bf16.msra.mxu0 %v577
    %986 = vmatpush.bf16.msra.mxu0 %v573
    %987 = vmatpush.bf16.msra.mxu0 %v569
    %988 = vmatpush.bf16.msra.mxu0 %v565
    %989 = vmatmul.bf16.gmra.mxu0 %v954
    %v990 = vpop.f32.mrf.mxu0
    %v991 = vadd.f32 0.0, %v990
    %v992 = vpop.f32.mrf.mxu0
    %993 = vdwg.mxu0
    %994 = vmatpush.bf16.msra.mxu0 %v594
    %995 = vmatpush.bf16.msra.mxu0 %v590
    %996 = vmatpush.bf16.msra.mxu0 %v586
    %997 = vmatpush.bf16.msra.mxu0 %v582
    %998 = vmatpush.bf16.msra.mxu0 %v578
    %999 = vmatpush.bf16.msra.mxu0 %v574
    %1000 = vmatpush.bf16.msra.mxu0 %v570
    %1001 = vmatpush.bf16.msra.mxu0 %v566
    %1002 = vmatmul.bf16.gmra.mxu0 %v954
    %v1003 = vpop.f32.mrf.mxu0
    %v1004 = vadd.f32 0.0, %v1003
    %v1005 = vpop.f32.mrf.mxu0
    %1006 = vdwg.mxu0
    %v1007 = vadd.f32 %v950, %v965
    %v1008 = vadd.f32 %v951, %v978
    %v1009 = vadd.f32 %v952, %v991
    %v1010 = vadd.f32 %v953, %v1004
    %v1011 = vmul.f32 %v1007, 0.5
    %v1012 = vtanh.pop %v1011
    %v1013 = vmul.f32 %v1012, 0.5
    %v1014 = vadd.f32 %v1013, 0.5
    %v1015 = vmul.f32 %v1008, 0.5
    %v1016 = vtanh.pop %v1015
    %v1017 = vmul.f32 %v1016, 0.5
    %v1018 = vadd.f32 %v1017, 0.5
    %v1019 = vtanh.pop %v1009
    %v1020 = vmul.f32 %v1010, 0.5
    %v1021 = vtanh.pop %v1020
    %v1022 = vmul.f32 %v1021, 0.5
    %v1023 = vadd.f32 %v1022, 0.5
    %v1024 = vmul.f32 %v1018, %v944
    %v1025 = vmul.f32 %v1014, %v1019
    %v1026 = vadd.f32 %v1024, %v1025
    %v1027 = vtanh.pop %v1026
    %v1028 = vmul.f32 %v1023, %v1027
    %s1029 = smul.u32 5, 4
    %s1030 = smul.addr %s1029, 8
    %s1031 = scalar_lea.vmem [#allocation2], %s1030
    %v1032 = vld [vmem:[%s1031] sm:$0xff]
    %v1033 = vld [vmem:[%s1031 + $0x8] sm:$0xff]
    %v1034 = vld [vmem:[%s1031 + $0x10] sm:$0xff]
    %v1035 = vld [vmem:[%s1031 + $0x18] sm:$0xff]
    %v1036 = vpack.c.bf16 %v1028, %v1028
    %1037 = vmatpush.bf16.msra.mxu0 %v591
    %1038 = vmatpush.bf16.msra.mxu0 %v587
    %1039 = vmatpush.bf16.msra.mxu0 %v583
    %1040 = vmatpush.bf16.msra.mxu0 %v579
    %1041 = vmatpush.bf16.msra.mxu0 %v575
    %1042 = vmatpush.bf16.msra.mxu0 %v571
    %1043 = vmatpush.bf16.msra.mxu0 %v567
    %1044 = vmatpush.bf16.msra.mxu0 %v563
    %1045 = vmatmul.bf16.gmra.mxu0 %v1036
    %v1046 = vpop.f32.mrf.mxu0
    %v1047 = vadd.f32 0.0, %v1046
    %v1048 = vpop.f32.mrf.mxu0
    %1049 = vdwg.mxu0
    %1050 = vmatpush.bf16.msra.mxu0 %v592
    %1051 = vmatpush.bf16.msra.mxu0 %v588
    %1052 = vmatpush.bf16.msra.mxu0 %v584
    %1053 = vmatpush.bf16.msra.mxu0 %v580
    %1054 = vmatpush.bf16.msra.mxu0 %v576
    %1055 = vmatpush.bf16.msra.mxu0 %v572
    %1056 = vmatpush.bf16.msra.mxu0 %v568
    %1057 = vmatpush.bf16.msra.mxu0 %v564
    %1058 = vmatmul.bf16.gmra.mxu0 %v1036
    %v1059 = vpop.f32.mrf.mxu0
    %v1060 = vadd.f32 0.0, %v1059
    %v1061 = vpop.f32.mrf.mxu0
    %1062 = vdwg.mxu0
    %1063 = vmatpush.bf16.msra.mxu0 %v593
    %1064 = vmatpush.bf16.msra.mxu0 %v589
    %1065 = vmatpush.bf16.msra.mxu0 %v585
    %1066 = vmatpush.bf16.msra.mxu0 %v581
    %1067 = vmatpush.bf16.msra.mxu0 %v577
    %1068 = vmatpush.bf16.msra.mxu0 %v573
    %1069 = vmatpush.bf16.msra.mxu0 %v569
    %1070 = vmatpush.bf16.msra.mxu0 %v565
    %1071 = vmatmul.bf16.gmra.mxu0 %v1036
    %v1072 = vpop.f32.mrf.mxu0
    %v1073 = vadd.f32 0.0, %v1072
    %v1074 = vpop.f32.mrf.mxu0
    %1075 = vdwg.mxu0
    %1076 = vmatpush.bf16.msra.mxu0 %v594
    %1077 = vmatpush.bf16.msra.mxu0 %v590
    %1078 = vmatpush.bf16.msra.mxu0 %v586
    %1079 = vmatpush.bf16.msra.mxu0 %v582
    %1080 = vmatpush.bf16.msra.mxu0 %v578
    %1081 = vmatpush.bf16.msra.mxu0 %v574
    %1082 = vmatpush.bf16.msra.mxu0 %v570
    %1083 = vmatpush.bf16.msra.mxu0 %v566
    %1084 = vmatmul.bf16.gmra.mxu0 %v1036
    %v1085 = vpop.f32.mrf.mxu0
    %v1086 = vadd.f32 0.0, %v1085
    %v1087 = vpop.f32.mrf.mxu0
    %1088 = vdwg.mxu0
    %v1089 = vadd.f32 %v1032, %v1047
    %v1090 = vadd.f32 %v1033, %v1060
    %v1091 = vadd.f32 %v1034, %v1073
    %v1092 = vadd.f32 %v1035, %v1086
    %v1093 = vmul.f32 %v1089, 0.5
    %v1094 = vtanh.pop %v1093
    %v1095 = vmul.f32 %v1094, 0.5
    %v1096 = vadd.f32 %v1095, 0.5
    %v1097 = vmul.f32 %v1090, 0.5
    %v1098 = vtanh.pop %v1097
    %v1099 = vmul.f32 %v1098, 0.5
    %v1100 = vadd.f32 %v1099, 0.5
    %v1101 = vtanh.pop %v1091
    %v1102 = vmul.f32 %v1092, 0.5
    %v1103 = vtanh.pop %v1102
    %v1104 = vmul.f32 %v1103, 0.5
    %v1105 = vadd.f32 %v1104, 0.5
    %v1106 = vmul.f32 %v1100, %v1026
    %v1107 = vmul.f32 %v1096, %v1101
    %v1108 = vadd.f32 %v1106, %v1107
    %v1109 = vtanh.pop %v1108
    %v1110 = vmul.f32 %v1105, %v1109
    %s1111 = smul.u32 6, 4
    %s1112 = smul.addr %s1111, 8
    %s1113 = scalar_lea.vmem [#allocation2], %s1112
    %v1114 = vld [vmem:[%s1113] sm:$0xff]
    %v1115 = vld [vmem:[%s1113 + $0x8] sm:$0xff]
    %v1116 = vld [vmem:[%s1113 + $0x10] sm:$0xff]
    %v1117 = vld [vmem:[%s1113 + $0x18] sm:$0xff]
    %v1118 = vpack.c.bf16 %v1110, %v1110
    %1119 = vmatpush.bf16.msra.mxu0 %v591
    %1120 = vmatpush.bf16.msra.mxu0 %v587
    %1121 = vmatpush.bf16.msra.mxu0 %v583
    %1122 = vmatpush.bf16.msra.mxu0 %v579
    %1123 = vmatpush.bf16.msra.mxu0 %v575
    %1124 = vmatpush.bf16.msra.mxu0 %v571
    %1125 = vmatpush.bf16.msra.mxu0 %v567
    %1126 = vmatpush.bf16.msra.mxu0 %v563
    %1127 = vmatmul.bf16.gmra.mxu0 %v1118
    %v1128 = vpop.f32.mrf.mxu0
    %v1129 = vadd.f32 0.0, %v1128
    %v1130 = vpop.f32.mrf.mxu0
    %1131 = vdwg.mxu0
    %1132 = vmatpush.bf16.msra.mxu0 %v592
    %1133 = vmatpush.bf16.msra.mxu0 %v588
    %1134 = vmatpush.bf16.msra.mxu0 %v584
    %1135 = vmatpush.bf16.msra.mxu0 %v580
    %1136 = vmatpush.bf16.msra.mxu0 %v576
    %1137 = vmatpush.bf16.msra.mxu0 %v572
    %1138 = vmatpush.bf16.msra.mxu0 %v568
    %1139 = vmatpush.bf16.msra.mxu0 %v564
    %1140 = vmatmul.bf16.gmra.mxu0 %v1118
    %v1141 = vpop.f32.mrf.mxu0
    %v1142 = vadd.f32 0.0, %v1141
    %v1143 = vpop.f32.mrf.mxu0
    %1144 = vdwg.mxu0
    %1145 = vmatpush.bf16.msra.mxu0 %v593
    %1146 = vmatpush.bf16.msra.mxu0 %v589
    %1147 = vmatpush.bf16.msra.mxu0 %v585
    %1148 = vmatpush.bf16.msra.mxu0 %v581
    %1149 = vmatpush.bf16.msra.mxu0 %v577
    %1150 = vmatpush.bf16.msra.mxu0 %v573
    %1151 = vmatpush.bf16.msra.mxu0 %v569
    %1152 = vmatpush.bf16.msra.mxu0 %v565
    %1153 = vmatmul.bf16.gmra.mxu0 %v1118
    %v1154 = vpop.f32.mrf.mxu0
    %v1155 = vadd.f32 0.0, %v1154
    %v1156 = vpop.f32.mrf.mxu0
    %1157 = vdwg.mxu0
    %1158 = vmatpush.bf16.msra.mxu0 %v594
    %1159 = vmatpush.bf16.msra.mxu0 %v590
    %1160 = vmatpush.bf16.msra.mxu0 %v586
    %1161 = vmatpush.bf16.msra.mxu0 %v582
    %1162 = vmatpush.bf16.msra.mxu0 %v578
    %1163 = vmatpush.bf16.msra.mxu0 %v574
    %1164 = vmatpush.bf16.msra.mxu0 %v570
    %1165 = vmatpush.bf16.msra.mxu0 %v566
    %1166 = vmatmul.bf16.gmra.mxu0 %v1118
    %v1167 = vpop.f32.mrf.mxu0
    %v1168 = vadd.f32 0.0, %v1167
    %v1169 = vpop.f32.mrf.mxu0
    %1170 = vdwg.mxu0
    %v1171 = vadd.f32 %v1114, %v1129
    %v1172 = vadd.f32 %v1115, %v1142
    %v1173 = vadd.f32 %v1116, %v1155
    %v1174 = vadd.f32 %v1117, %v1168
    %v1175 = vmul.f32 %v1171, 0.5
    %v1176 = vtanh.pop %v1175
    %v1177 = vmul.f32 %v1176, 0.5
    %v1178 = vadd.f32 %v1177, 0.5
    %v1179 = vmul.f32 %v1172, 0.5
    %v1180 = vtanh.pop %v1179
    %v1181 = vmul.f32 %v1180, 0.5
    %v1182 = vadd.f32 %v1181, 0.5
    %v1183 = vtanh.pop %v1173
    %v1184 = vmul.f32 %v1174, 0.5
    %v1185 = vtanh.pop %v1184
    %v1186 = vmul.f32 %v1185, 0.5
    %v1187 = vadd.f32 %v1186, 0.5
    %v1188 = vmul.f32 %v1182, %v1108
    %v1189 = vmul.f32 %v1178, %v1183
    %v1190 = vadd.f32 %v1188, %v1189
    %v1191 = vtanh.pop %v1190
    %v1192 = vmul.f32 %v1187, %v1191
    %s1193 = smul.u32 7, 4
    %s1194 = smul.addr %s1193, 8
    %s1195 = scalar_lea.vmem [#allocation2], %s1194
    %v1196 = vld [vmem:[%s1195] sm:$0xff]
    %v1197 = vld [vmem:[%s1195 + $0x8] sm:$0xff]
    %v1198 = vld [vmem:[%s1195 + $0x10] sm:$0xff]
    %v1199 = vld [vmem:[%s1195 + $0x18] sm:$0xff]
    %v1200 = vpack.c.bf16 %v1192, %v1192
    %1201 = vmatpush.bf16.msra.mxu0 %v591
    %1202 = vmatpush.bf16.msra.mxu0 %v587
    %1203 = vmatpush.bf16.msra.mxu0 %v583
    %1204 = vmatpush.bf16.msra.mxu0 %v579
    %1205 = vmatpush.bf16.msra.mxu0 %v575
    %1206 = vmatpush.bf16.msra.mxu0 %v571
    %1207 = vmatpush.bf16.msra.mxu0 %v567
    %1208 = vmatpush.bf16.msra.mxu0 %v563
    %1209 = vmatmul.bf16.gmra.mxu0 %v1200
    %v1210 = vpop.f32.mrf.mxu0
    %v1211 = vadd.f32 0.0, %v1210
    %v1212 = vpop.f32.mrf.mxu0
    %1213 = vdwg.mxu0
    %1214 = vmatpush.bf16.msra.mxu0 %v592
    %1215 = vmatpush.bf16.msra.mxu0 %v588
    %1216 = vmatpush.bf16.msra.mxu0 %v584
    %1217 = vmatpush.bf16.msra.mxu0 %v580
    %1218 = vmatpush.bf16.msra.mxu0 %v576
    %1219 = vmatpush.bf16.msra.mxu0 %v572
    %1220 = vmatpush.bf16.msra.mxu0 %v568
    %1221 = vmatpush.bf16.msra.mxu0 %v564
    %1222 = vmatmul.bf16.gmra.mxu0 %v1200
    %v1223 = vpop.f32.mrf.mxu0
    %v1224 = vadd.f32 0.0, %v1223
    %v1225 = vpop.f32.mrf.mxu0
    %1226 = vdwg.mxu0
    %1227 = vmatpush.bf16.msra.mxu0 %v593
    %1228 = vmatpush.bf16.msra.mxu0 %v589
    %1229 = vmatpush.bf16.msra.mxu0 %v585
    %1230 = vmatpush.bf16.msra.mxu0 %v581
    %1231 = vmatpush.bf16.msra.mxu0 %v577
    %1232 = vmatpush.bf16.msra.mxu0 %v573
    %1233 = vmatpush.bf16.msra.mxu0 %v569
    %1234 = vmatpush.bf16.msra.mxu0 %v565
    %1235 = vmatmul.bf16.gmra.mxu0 %v1200
    %v1236 = vpop.f32.mrf.mxu0
    %v1237 = vadd.f32 0.0, %v1236
    %v1238 = vpop.f32.mrf.mxu0
    %1239 = vdwg.mxu0
    %1240 = vmatpush.bf16.msra.mxu0 %v594
    %1241 = vmatpush.bf16.msra.mxu0 %v590
    %1242 = vmatpush.bf16.msra.mxu0 %v586
    %1243 = vmatpush.bf16.msra.mxu0 %v582
    %1244 = vmatpush.bf16.msra.mxu0 %v578
    %1245 = vmatpush.bf16.msra.mxu0 %v574
    %1246 = vmatpush.bf16.msra.mxu0 %v570
    %1247 = vmatpush.bf16.msra.mxu0 %v566
    %1248 = vmatmul.bf16.gmra.mxu0 %v1200
    %v1249 = vpop.f32.mrf.mxu0
    %v1250 = vadd.f32 0.0, %v1249
    %v1251 = vpop.f32.mrf.mxu0
    %1252 = vdwg.mxu0
    %v1253 = vadd.f32 %v1196, %v1211
    %v1254 = vadd.f32 %v1197, %v1224
    %v1255 = vadd.f32 %v1198, %v1237
    %v1256 = vadd.f32 %v1199, %v1250
    %v1257 = vmul.f32 %v1253, 0.5
    %v1258 = vtanh.pop %v1257
    %v1259 = vmul.f32 %v1258, 0.5
    %v1260 = vadd.f32 %v1259, 0.5
    %v1261 = vmul.f32 %v1254, 0.5
    %v1262 = vtanh.pop %v1261
    %v1263 = vmul.f32 %v1262, 0.5
    %v1264 = vadd.f32 %v1263, 0.5
    %v1265 = vtanh.pop %v1255
    %v1266 = vmul.f32 %v1256, 0.5
    %v1267 = vtanh.pop %v1266
    %v1268 = vmul.f32 %v1267, 0.5
    %v1269 = vadd.f32 %v1268, 0.5
    %v1270 = vmul.f32 %v1264, %v1190
    %v1271 = vmul.f32 %v1260, %v1265
    %v1272 = vadd.f32 %v1270, %v1271
    %v1273 = vtanh.pop %v1272
    %v1274 = vmul.f32 %v1269, %v1273
    %v1275 = vld [vmem:[%s4] sm:$0xff]
    %v1276 = vld [vmem:[%s4 + $0x8] sm:$0xff]
    %v1277 = vld [vmem:[%s4 + $0x10] sm:$0xff]
    %v1278 = vld [vmem:[%s4 + $0x18] sm:$0xff]
    %v1279 = vld [vmem:[%s4 + $0x20] sm:$0xff]
    %v1280 = vld [vmem:[%s4 + $0x28] sm:$0xff]
    %v1281 = vld [vmem:[%s4 + $0x30] sm:$0xff]
    %v1282 = vld [vmem:[%s4 + $0x38] sm:$0xff]
    %v1283 = vld [vmem:[%s4 + $0x40] sm:$0xff]
    %v1284 = vld [vmem:[%s4 + $0x48] sm:$0xff]
    %v1285 = vld [vmem:[%s4 + $0x50] sm:$0xff]
    %v1286 = vld [vmem:[%s4 + $0x58] sm:$0xff]
    %v1287 = vld [vmem:[%s4 + $0x60] sm:$0xff]
    %v1288 = vld [vmem:[%s4 + $0x68] sm:$0xff]
    %v1289 = vld [vmem:[%s4 + $0x70] sm:$0xff]
    %v1290 = vld [vmem:[%s4 + $0x78] sm:$0xff]
    %v1291 = vld [vmem:[%s5] sm:$0x1]
    %v1293 = vperm.slane %v1291, 0
    %1295 = vmatpush.msra.mxu0 %v1290
    %1296 = vmatpush.msra.mxu0 %v1289
    %1297 = vmatpush.msra.mxu0 %v1288
    %1298 = vmatpush.msra.mxu0 %v1287
    %1299 = vmatpush.msra.mxu0 %v1286
    %1300 = vmatpush.msra.mxu0 %v1285
    %1301 = vmatpush.msra.mxu0 %v1284
    %1302 = vmatpush.msra.mxu0 %v1283
    %1303 = vmatpush.msra.mxu0 %v1282
    %1304 = vmatpush.msra.mxu0 %v1281
    %1305 = vmatpush.msra.mxu0 %v1280
    %1306 = vmatpush.msra.mxu0 %v1279
    %1307 = vmatpush.msra.mxu0 %v1278
    %1308 = vmatpush.msra.mxu0 %v1277
    %1309 = vmatpush.msra.mxu0 %v1276
    %1310 = vmatpush.msra.mxu0 %v1275
    %1311 = vmatmul.f32.gmra.mxu0 %v1274
    %v1312 = vpop.f32.mrf.mxu0
    %v1313 = vadd.f32 %v1293, %v1312
    %1314 = vdwg.mxu0
    %v1315 = vld [vmem:[%s6] sm:$0xff]
    %v1316 = vld [vmem:[%s6 + $0x8] sm:$0xff]
    %v1317 = vld [vmem:[%s6 + $0x10] sm:$0xff]
    %v1318 = vld [vmem:[%s6 + $0x18] sm:$0xff]
    %v1319 = vld [vmem:[%s6 + $0x20] sm:$0xff]
    %v1320 = vld [vmem:[%s6 + $0x28] sm:$0xff]
    %v1321 = vld [vmem:[%s6 + $0x30] sm:$0xff]
    %v1322 = vld [vmem:[%s6 + $0x38] sm:$0xff]
    %v1323 = vld [vmem:[%s7] sm:$0x1]
    %v1325 = vperm.slane %v1323, 0
    %vm1327 = vcmask 523264
    %v1329 = vsel %vm1327, %v1313, 0
    %1331 = vmatpush.msra.mxu0 0.0
    %1332 = vmatpush.msra.mxu0 0.0
    %1333 = vmatpush.msra.mxu0 0.0
    %1334 = vmatpush.msra.mxu0 0.0
    %1335 = vmatpush.msra.mxu0 0.0
    %1336 = vmatpush.msra.mxu0 0.0
    %1337 = vmatpush.msra.mxu0 0.0
    %1338 = vmatpush.msra.mxu0 0.0
    %1339 = vmatpush.msra.mxu0 %v1322
    %1340 = vmatpush.msra.mxu0 %v1321
    %1341 = vmatpush.msra.mxu0 %v1320
    %1342 = vmatpush.msra.mxu0 %v1319
    %1343 = vmatpush.msra.mxu0 %v1318
    %1344 = vmatpush.msra.mxu0 %v1317
    %1345 = vmatpush.msra.mxu0 %v1316
    %1346 = vmatpush.msra.mxu0 %v1315
    %1347 = vmatmul.f32.gmra.mxu0 %v1329
    %v1348 = vpop.f32.mrf.mxu0
    %v1349 = vadd.f32 %v1325, %v1348
    %1350 = vdwg.mxu0
    %1351 = vst [vmem:[%s8] sm:$0xff] %v1349
    // Predicated region
    $region38: #{rnn_forward.1} parent=1 // pred_check
      _
    $region39: #{rnn_forward.1} parent=1 // pred_check_branch
      %1353 = sbr.rel (0) target = $region41
    $region40: #{rnn_forward.1} parent=1 // pred_region
      _
    $region41: #{rnn_forward.1} parent=1 // pred_fallthru
      _
    // Predicated region
    $region42: #{rnn_forward.1} parent=1 // pred_check
      _
    $region43: #{rnn_forward.1} parent=1 // pred_check_branch
      %1355 = sbr.rel (0) target = $region45
    $region44: #{rnn_forward.1} parent=1 // pred_region
      _
    $region45: #{rnn_forward.1} parent=1 // pred_fallthru
      _
    %1356 = vsyncpa [#allocation4], 1

</llo_original>
